<compile_context>
chip_gen: v7x
topology: tpu7x:2x2x1
jax: 0.10.0
libtpu: 0.0.40
codegen_flags: <defaults>
</compile_context>

<pallas_src>
import jax
import jax.numpy as jnp
from jax import lax
from jax.experimental import pallas as pl
from jax.experimental.pallas import tpu as pltpu


# ------------------------------ Pallas kernel ------------------------------ #

def _fused_forward_kernel(x_ref, sig_ref,
                          w1_ref, b1_ref, w2_ref, b2_ref,
                          wf_ref, bf_ref, wl_ref,
                          o_ref):
    """Fused receiver forward (one MXU GEMM chain, everything in VMEM/vregs).

    x_ref  : (B*G, H*W*Cin) f32   channel-last flattened candidate images
    sig_ref: (B*G, emb)     f32   signal row-replicated per candidate
    w1/w2  : conv1/conv2 packed as GEMM matrices, bf16
    b1/b2  : matching NHWC-flat bias rows, f32
    wf/bf  : fc weight (flat, hidden) bf16, bias (1, hidden) f32
    wl     : lin2 weight (emb, hidden) bf16, no bias
    o_ref  : (B*G, 1) f32   score per (batch, candidate) row
    """
    # conv1 (as GEMM, bf16 operands, f32 acc) + bias + ReLU  -> (B*G, OH1*OW1*16)
    h1 = jnp.dot(x_ref[...].astype(jnp.bfloat16), w1_ref[...],
                 preferred_element_type=jnp.float32)
    h1 = jnp.maximum(h1 + b1_ref[...], 0.0)
    # conv2 (as GEMM) + bias + ReLU                          -> (B*G, OH2*OW2*32)
    h2 = jnp.dot(h1.astype(jnp.bfloat16), w2_ref[...],
                 preferred_element_type=jnp.float32)
    h2 = jnp.maximum(h2 + b2_ref[...], 0.0)
    # fc                                                     -> (B*G, hidden)
    hf = jnp.dot(h2.astype(jnp.bfloat16), wf_ref[...],
                 preferred_element_type=jnp.float32) + bf_ref[...]
    # h_s = relu(lin2(signal)), per row (signal already replicated)
    hs = jnp.maximum(
        jnp.dot(sig_ref[...].astype(jnp.bfloat16), wl_ref[...],
                preferred_element_type=jnp.float32), 0.0)
    # bmm(embs, h_s) == per-row dot over hidden              -> (B*G, 1)
    o_ref[...] = jnp.sum(hf * hs, axis=-1, keepdims=True)


# --------------------------- weight packing (once) -------------------------- #

def _conv_as_gemm(w_oihw, b, stride, pad, in_hwc):
    """Pack a PyTorch-layout conv (OIHW weight, per-Cout bias) into a dense
    matrix M and bias row so that flat_NHWC(conv(x)) == flat_NHWC(x) @ M + bias.
    Built once at init by pushing an identity basis through lax.conv; every
    entry of M is exactly one original conv weight (or exactly zero)."""
    H, W, C = in_hwc
    n = H * W * C
    w_hwio = jnp.transpose(w_oihw, (2, 3, 1, 0))
    eye = jnp.eye(n, dtype=jnp.float32).reshape(n, H, W, C)
    y = lax.conv_general_dilated(
        eye, w_hwio, (stride, stride), [(pad, pad), (pad, pad)],
        dimension_numbers=("NHWC", "HWIO", "NHWC"))
    oh, ow, cout = y.shape[1:]
    mat = y.reshape(n, oh * ow * cout)                     # (in_flat, out_flat)
    bias = jnp.tile(b, oh * ow).reshape(1, oh * ow * cout)
    return mat, bias, (oh, ow, cout)


def init_params(key, c_in, spatial, hidden_size, embedding_size):
    """PyTorch-style uniform(-1/sqrt(fan_in), 1/sqrt(fan_in)) init, f32.
    Linear weights are stored (in, out) so no per-forward transpose."""
    ks = jax.random.split(key, 7)

    def u(k, shape, fan_in):
        bound = 1.0 / float(fan_in) ** 0.5
        return jax.random.uniform(k, shape, jnp.float32, -bound, bound)

    s_fc = spatial // 4                      # two stride-2 convs
    flat = 32 * s_fc * s_fc                  # NHWC flatten of conv2 output
    return {
        "conv1_w": u(ks[0], (16, c_in, 4, 4), c_in * 16),
        "conv1_b": u(ks[1], (16,), c_in * 16),
        "conv2_w": u(ks[2], (32, 16, 4, 4), 16 * 16),
        "conv2_b": u(ks[3], (32,), 16 * 16),
        "fc_w":    u(ks[4], (flat, hidden_size), flat),
        "fc_b":    u(ks[5], (hidden_size,), flat),
        "lin2_w":  u(ks[6], (embedding_size, hidden_size), embedding_size),
    }


def pack_params(params, c_in, spatial):
    """One-time packing of all weights into the kernel's GEMM layouts.
    Big matrices are stored bf16 (halves per-call HBM->VMEM weight DMA);
    biases stay f32 (added post-MXU in f32)."""
    w1, b1, (oh1, ow1, c1) = _conv_as_gemm(
        params["conv1_w"], params["conv1_b"], 2, 1, (spatial, spatial, c_in))
    w2, b2, _ = _conv_as_gemm(
        params["conv2_w"], params["conv2_b"], 2, 1, (oh1, ow1, c1))
    return {
        "w1": w1.astype(jnp.bfloat16), "b1": b1,
        "w2": w2.astype(jnp.bfloat16), "b2": b2,
        "wf": params["fc_w"].astype(jnp.bfloat16),
        "bf": params["fc_b"].reshape(1, -1),
        "wl": params["lin2_w"].astype(jnp.bfloat16),
    }


# ------------------------------ forward wrapper ----------------------------- #

def prepare_candidates(candidates):
    """One-time conversion: list of G (B, C, H, W) arrays -> (B, G, H, W, C)."""
    x = jnp.stack(candidates, axis=1)               # (B, G, C, H, W)
    return jnp.transpose(x, (0, 1, 3, 4, 2))        # (B, G, H, W, C)


@jax.jit
def _forward_core(packed, signal, cand_nhwc):
    """Hot path. cand_nhwc: (B, G, H, W, C) f32, pre-stacked channel-last."""
    B, G = cand_nhwc.shape[:2]
    # Contiguous -> free reshape; row b*G+g is candidate g of batch item b.
    x = cand_nhwc.reshape(B * G, -1).astype(jnp.float32)

    if signal.ndim == 3:
        signal = jnp.squeeze(signal, axis=-1)
    # Replicate each batch row G times so row b*G+g pairs with candidate (b, g).
    sig = jnp.repeat(signal.astype(jnp.float32), G, axis=0)

    operands = (x, sig,
                packed["w1"], packed["b1"], packed["w2"], packed["b2"],
                packed["wf"], packed["bf"], packed["wl"])

    # Advisory cost estimate so XLA schedules/overlaps the custom call well
    # (the kernel is DMA + fixed-overhead bound, compute ~13 MFLOP).
    M = B * G
    flops = 2 * M * (packed["w1"].shape[0] * packed["w1"].shape[1]
                     + packed["w2"].shape[0] * packed["w2"].shape[1]
                     + packed["wf"].shape[0] * packed["wf"].shape[1]
                     + packed["wl"].shape[0] * packed["wl"].shape[1])
    bytes_accessed = sum(int(a.size) * a.dtype.itemsize for a in operands) + M * 4

    out = pl.pallas_call(
        _fused_forward_kernel,
        out_shape=jax.ShapeDtypeStruct((M, 1), jnp.float32),
        in_specs=[pl.BlockSpec(memory_space=pltpu.MemorySpace.VMEM)] * len(operands),
        out_specs=pl.BlockSpec(memory_space=pltpu.MemorySpace.VMEM),
        cost_estimate=pl.CostEstimate(flops=int(flops), transcendentals=0,
                                      bytes_accessed=int(bytes_accessed)),
    )(*operands)
    return out.reshape(B, G)


def receiver_forward(packed, signal, candidates):
    """Matches DSpritesReceiverCNN.forward (reinforce=False branch).

    `candidates` may be the module-style Python list of G (B, C, H, W) arrays
    (converted once here) or, preferably, one pre-stacked (B, G, H, W, C)
    array so the per-call stack/transpose is avoided entirely."""
    if isinstance(candidates, (list, tuple)):
        candidates = prepare_candidates(candidates)
    return _forward_core(packed, signal, candidates)


# ----------------------------- pure-JAX references -------------------------- #

def _conv_ref(x_nhwc, w_oihw, b, stride, pad):
    w_hwio = jnp.transpose(w_oihw, (2, 3, 1, 0))
    y = lax.conv_general_dilated(
        x_nhwc, w_hwio, (stride, stride), [(pad, pad), (pad, pad)],
        dimension_numbers=("NHWC", "HWIO", "NHWC"))
    return y + b[None, None, None, :]


def ref_forward(params, signal, candidates):
    """Full-f32 reference (original module semantics)."""
    # TODO(synk): DspritesSenderCNN's exact architecture is not in the reference
    # snippet; the encoder is a representative 2x(Conv4x4,s2,p1)+ReLU ->
    # flatten -> Linear(hidden) stand-in (same one the kernel implements).
    def enc(x_nchw):
        x = jnp.transpose(x_nchw, (0, 2, 3, 1))
        h = jax.nn.relu(_conv_ref(x, params["conv1_w"], params["conv1_b"], 2, 1))
        h = jax.nn.relu(_conv_ref(h, params["conv2_w"], params["conv2_b"], 2, 1))
        h = h.reshape(h.shape[0], -1)                      # NHWC flatten
        return h @ params["fc_w"] + params["fc_b"]

    embs = jnp.stack([enc(c) for c in candidates], axis=1)  # (B, G, hidden)
    if signal.ndim == 3:
        signal = jnp.squeeze(signal, axis=-1)
    h_s = jax.nn.relu(signal @ params["lin2_w"])             # (B, hidden)
    return jnp.einsum("bgh,bh->bg", embs, h_s)


def _q(a):
    """bf16 round-trip (mirrors the kernel's bf16 MXU operands / bf16 weights)."""
    return a.astype(jnp.bfloat16).astype(jnp.float32)


def ref_forward_mixed(params, signal, candidates):
    """Reference with bf16 rounding applied at exactly the kernel's cast points
    (weights + dot operands bf16, f32 accumulation, f32 bias/ReLU)."""
    def conv(x, w_oihw, b, stride, pad):
        return _conv_ref(_q(x), _q(w_oihw), b, stride, pad)

    def enc(x_nchw):
        x = jnp.transpose(x_nchw, (0, 2, 3, 1))
        h = jax.nn.relu(conv(x, params["conv1_w"], params["conv1_b"], 2, 1))
        h = jax.nn.relu(conv(h, params["conv2_w"], params["conv2_b"], 2, 1))
        h = h.reshape(h.shape[0], -1)
        return _q(h) @ _q(params["fc_w"]) + params["fc_b"]

    embs = jnp.stack([enc(c) for c in candidates], axis=1)
    if signal.ndim == 3:
        signal = jnp.squeeze(signal, axis=-1)
    h_s = jax.nn.relu(_q(signal) @ _q(params["lin2_w"]))
    return jnp.einsum("bgh,bh->bg", embs, h_s)


# ------------------------------------ main ---------------------------------- #

if __name__ == "__main__":
    B, GAME_SIZE, EMB_SIZE, HIDDEN = 2, 4, 16, 32
    C_IN, SPATIAL = 1, 16

    key = jax.random.PRNGKey(0)
    pkey, skey, ckey = jax.random.split(key, 3)

    params = init_params(pkey, C_IN, SPATIAL, HIDDEN, EMB_SIZE)
    packed = jax.tree.map(jax.block_until_ready, pack_params(params, C_IN, SPATIAL))

    signal = jax.random.normal(skey, (B, EMB_SIZE), jnp.float32)
    ckeys = jax.random.split(ckey, GAME_SIZE)
    candidates = [jax.random.normal(k, (B, C_IN, SPATIAL, SPATIAL), jnp.float32)
                  for k in ckeys]
    # Hot-path input format (review item 5): pre-stack once, outside the step.
    cand_nhwc = jax.block_until_ready(prepare_candidates(candidates))

    out = receiver_forward(packed, signal, cand_nhwc)
    out = jax.block_until_ready(out)
    assert out.shape == (B, GAME_SIZE), out.shape

    # Tight check vs. a reference with identical bf16 rounding points.
    ref_mixed = ref_forward_mixed(params, signal, candidates)
    assert jnp.allclose(out, ref_mixed, atol=2e-3, rtol=2e-3), (out, ref_mixed)

    # Semantics sanity check vs. the full-f32 module forward (tolerance covers
    # the bf16 mixed-precision weight/operand rounding only).
    ref32 = ref_forward(params, signal, candidates)
    assert jnp.allclose(out, ref32, atol=5e-2, rtol=5e-2), (out, ref32)

    print("KERNEL_OK")
</pallas_src>

<mosaic_0001>
module attributes {stable_mosaic.version = 11 : i64} {
  func.func @_fused_forward_kernel(%arg0: memref<8x256xf32, #tpu.memory_space<vmem>>, %arg1: memref<8x16xf32, #tpu.memory_space<vmem>>, %arg2: memref<256x1024xbf16, #tpu.memory_space<vmem>>, %arg3: memref<1x1024xf32, #tpu.memory_space<vmem>>, %arg4: memref<1024x512xbf16, #tpu.memory_space<vmem>>, %arg5: memref<1x512xf32, #tpu.memory_space<vmem>>, %arg6: memref<512x32xbf16, #tpu.memory_space<vmem>>, %arg7: memref<1x32xf32, #tpu.memory_space<vmem>>, %arg8: memref<16x32xbf16, #tpu.memory_space<vmem>>, %arg9: memref<8x1xf32, #tpu.memory_space<vmem>>) attributes {dimension_semantics = [], scalar_prefetch = 0 : i64, scratch_operands = 0 : i64, tpu.core_type = #tpu.core_type<tc>} {
    %c0 = arith.constant 0 : index
    %c0_0 = arith.constant 0 : index
    %0 = vector.load %arg0[%c0, %c0_0] : memref<8x256xf32, #tpu.memory_space<vmem>>, vector<8x256xf32>
    %1 = arith.truncf %0 : vector<8x256xf32> to vector<8x256xbf16>
    %c0_1 = arith.constant 0 : index
    %c0_2 = arith.constant 0 : index
    %2 = vector.load %arg2[%c0_1, %c0_2] : memref<256x1024xbf16, #tpu.memory_space<vmem>>, vector<256x1024xbf16>
    %cst = arith.constant dense<0.000000e+00> : vector<8x1024xf32>
    %3 = tpu.matmul %1, %2, %cst {dimension_numbers = #tpu.dot_dimension_numbers<[1], [0], [0], [1], [0, 0, 1, 1], [], []>} : vector<8x256xbf16>, vector<256x1024xbf16>, vector<8x1024xf32> -> vector<8x1024xf32>
    %c0_3 = arith.constant 0 : index
    %c0_4 = arith.constant 0 : index
    %4 = vector.load %arg3[%c0_3, %c0_4] : memref<1x1024xf32, #tpu.memory_space<vmem>>, vector<1x1024xf32>
    %5 = vector.broadcast %4 : vector<1x1024xf32> to vector<8x1024xf32>
    %6 = arith.addf %3, %5 : vector<8x1024xf32>
    %cst_5 = arith.constant 0.000000e+00 : f32
    %7 = vector.broadcast %cst_5 : f32 to vector<8x1024xf32>
    %8 = arith.maximumf %6, %7 : vector<8x1024xf32>
    %9 = arith.truncf %8 : vector<8x1024xf32> to vector<8x1024xbf16>
    %c0_6 = arith.constant 0 : index
    %c0_7 = arith.constant 0 : index
    %10 = vector.load %arg4[%c0_6, %c0_7] : memref<1024x512xbf16, #tpu.memory_space<vmem>>, vector<1024x512xbf16>
    %cst_8 = arith.constant dense<0.000000e+00> : vector<8x512xf32>
    %11 = tpu.matmul %9, %10, %cst_8 {dimension_numbers = #tpu.dot_dimension_numbers<[1], [0], [0], [1], [0, 0, 1, 1], [], []>} : vector<8x1024xbf16>, vector<1024x512xbf16>, vector<8x512xf32> -> vector<8x512xf32>
    %c0_9 = arith.constant 0 : index
    %c0_10 = arith.constant 0 : index
    %12 = vector.load %arg5[%c0_9, %c0_10] : memref<1x512xf32, #tpu.memory_space<vmem>>, vector<1x512xf32>
    %13 = vector.broadcast %12 : vector<1x512xf32> to vector<8x512xf32>
    %14 = arith.addf %11, %13 : vector<8x512xf32>
    %cst_11 = arith.constant 0.000000e+00 : f32
    %15 = vector.broadcast %cst_11 : f32 to vector<8x512xf32>
    %16 = arith.maximumf %14, %15 : vector<8x512xf32>
    %17 = arith.truncf %16 : vector<8x512xf32> to vector<8x512xbf16>
    %c0_12 = arith.constant 0 : index
    %c0_13 = arith.constant 0 : index
    %18 = vector.load %arg6[%c0_12, %c0_13] : memref<512x32xbf16, #tpu.memory_space<vmem>>, vector<512x32xbf16>
    %cst_14 = arith.constant dense<0.000000e+00> : vector<8x32xf32>
    %19 = tpu.matmul %17, %18, %cst_14 {dimension_numbers = #tpu.dot_dimension_numbers<[1], [0], [0], [1], [0, 0, 1, 1], [], []>} : vector<8x512xbf16>, vector<512x32xbf16>, vector<8x32xf32> -> vector<8x32xf32>
    %c0_15 = arith.constant 0 : index
    %c0_16 = arith.constant 0 : index
    %20 = vector.load %arg7[%c0_15, %c0_16] : memref<1x32xf32, #tpu.memory_space<vmem>>, vector<1x32xf32>
    %21 = vector.broadcast %20 : vector<1x32xf32> to vector<8x32xf32>
    %22 = arith.addf %19, %21 : vector<8x32xf32>
    %c0_17 = arith.constant 0 : index
    %c0_18 = arith.constant 0 : index
    %23 = vector.load %arg1[%c0_17, %c0_18] : memref<8x16xf32, #tpu.memory_space<vmem>>, vector<8x16xf32>
    %24 = arith.truncf %23 : vector<8x16xf32> to vector<8x16xbf16>
    %c0_19 = arith.constant 0 : index
    %c0_20 = arith.constant 0 : index
    %25 = vector.load %arg8[%c0_19, %c0_20] : memref<16x32xbf16, #tpu.memory_space<vmem>>, vector<16x32xbf16>
    %cst_21 = arith.constant dense<0.000000e+00> : vector<8x32xf32>
    %26 = tpu.matmul %24, %25, %cst_21 {dimension_numbers = #tpu.dot_dimension_numbers<[1], [0], [0], [1], [0, 0, 1, 1], [], []>} : vector<8x16xbf16>, vector<16x32xbf16>, vector<8x32xf32> -> vector<8x32xf32>
    %cst_22 = arith.constant 0.000000e+00 : f32
    %27 = vector.broadcast %cst_22 : f32 to vector<8x32xf32>
    %28 = arith.maximumf %26, %27 : vector<8x32xf32>
    %29 = arith.mulf %22, %28 : vector<8x32xf32>
    %cst_23 = arith.constant dense<0.000000e+00> : vector<8xf32>
    %30 = vector.multi_reduction <add>, %29, %cst_23 [1] : vector<8x32xf32> to vector<8xf32>
    %31 = vector.shape_cast %30 : vector<8xf32> to vector<8x1xf32>
    %c0_24 = arith.constant 0 : index
    %c0_25 = arith.constant 0 : index
    %32 = vector.load %arg9[%c0_24, %c0_25] : memref<8x1xf32, #tpu.memory_space<vmem>>, vector<8x1xf32>
    tpu.vector_store %arg9[%c0_24, %c0_25], %31 {strides = array<i32>} : memref<8x1xf32, #tpu.memory_space<vmem>>, vector<8x1xf32>,
    return
  }
}

</mosaic_0001>

<llo_original>
// kernel: _forward_core.1
$region0: #{_forward_core.1}
  #allocation0 [shape = 'u32[]', space=smem, size = 0x4, offset = 0x4, fixed_abs, tag = 'smem constant byte address 0x4 - core index']
  #allocation1 [shape = 'u32[144,128]{1,0:T(1,128)}', space=vmem, size = 0x12000, scoped, tag = 'internal scratch']
  %s0 = inlined_call_operand.vmem [shape: f32[8,256], index: 0, kind: input, shape index: {}]
  %s1 = inlined_call_operand.vmem [shape: f32[8,16], index: 1, kind: input, shape index: {}]
  %s2 = inlined_call_operand.hbm [shape: bf16[256,1024], index: 2, kind: input, shape index: {}]
  %s3 = inlined_call_operand.vmem [shape: f32[1,1024], index: 3, kind: input, shape index: {}]
  %s4 = inlined_call_operand.hbm [shape: bf16[1024,512], index: 4, kind: input, shape index: {}]
  %s5 = inlined_call_operand.vmem [shape: f32[1,512], index: 5, kind: input, shape index: {}]
  %s6 = inlined_call_operand.vmem [shape: bf16[512,32], index: 6, kind: input, shape index: {}]
  %s7 = inlined_call_operand.vmem [shape: f32[1,32], index: 7, kind: input, shape index: {}]
  %s8 = inlined_call_operand.vmem [shape: bf16[16,32], index: 8, kind: input, shape index: {}]
  %s9 = inlined_call_operand.vmem [shape: f32[8,1], index: 9, kind: output, shape index: {}]
  %s10 = sld [smem:[#allocation0]]
  $region54: #{_forward_core.1} parent=0
    _
  %s12 = ssub.s32 1, %s10
  %s13 = scalar_select 0, %s12, %s10
  $region1: #{_forward_core.1} parent=0
    #allocation2 [shape = 'u8[524288]{0}', space=vmem, size = 0x80000, scoped, tag = 'input window, operand 2, single buffered']
    #allocation3 [shape = 's32[1]{0}', space=sflag, size = 0x4, scoped, tag = 'scoped memory for _forward_core.1']
    #allocation4 [shape = 'u8[1048576]{0}', space=vmem, size = 0x100000, scoped, tag = 'input window, operand 4, single buffered']
    #allocation5 [shape = 's32[1]{0}', space=sflag, size = 0x4, scoped, tag = 'scoped memory for _forward_core.1']
    %14 = vsyncpa [#allocation3], 0
    %15 = vsyncpa [#allocation5], 0
    // Predicated region
    $region2: #{_forward_core.1} parent=1 // pred_check
      _
    $region3: #{_forward_core.1} parent=1 // pred_check_branch
      %17 = sbr.rel (0) target = $region5
    $region4: #{_forward_core.1} parent=1 // pred_region
      _
    $region5: #{_forward_core.1} parent=1 // pred_fallthru
      _
    // Predicated region
    $region6: #{_forward_core.1} parent=1 // pred_check
      _
    $region7: #{_forward_core.1} parent=1 // pred_check_branch
      %19 = sbr.rel (0) target = $region9
    $region8: #{_forward_core.1} parent=1 // pred_region
      _
    $region9: #{_forward_core.1} parent=1 // pred_fallthru
      _
    // Predicated region
    $region10: #{_forward_core.1} parent=1 // pred_check
      _
    $region11: #{_forward_core.1} parent=1 // pred_check_branch
      %21 = sbr.rel (0) target = $region13
    $region12: #{_forward_core.1} parent=1 // pred_region
      %s23 = ssub.s32 16384, 16384
      %24 = vsyncadd [#allocation3], %s23
      %s25 = sshll.u32 [#allocation2], 4
      %s26 = int_to_ptr.vmem [resolvable:$true] %s25
      %31 = dma.hbm_to_vmem [thread:$0]  %s2, 16384, %s26, [#allocation3], 512, 512, 32
    $region13: #{_forward_core.1} parent=1 // pred_fallthru
      _
    // Predicated region
    $region14: #{_forward_core.1} parent=1 // pred_check
      _
    $region15: #{_forward_core.1} parent=1 // pred_check_branch
      %33 = sbr.rel (0) target = $region17
    $region16: #{_forward_core.1} parent=1 // pred_region
      _
    $region17: #{_forward_core.1} parent=1 // pred_fallthru
      _
    // Predicated region
    $region18: #{_forward_core.1} parent=1 // pred_check
      _
    $region19: #{_forward_core.1} parent=1 // pred_check_branch
      %35 = sbr.rel (0) target = $region21
    $region20: #{_forward_core.1} parent=1 // pred_region
      %s37 = ssub.s32 32768, 32768
      %38 = vsyncadd [#allocation5], %s37
      %s39 = sshll.u32 [#allocation4], 4
      %s40 = int_to_ptr.vmem [resolvable:$true] %s39
      %45 = dma.hbm_to_vmem [thread:$0]  %s4, 32768, %s40, [#allocation5], 256, 256, 16
    $region21: #{_forward_core.1} parent=1 // pred_fallthru
      _
    // Predicated region
    $region22: #{_forward_core.1} parent=1 // pred_check
      _
    $region23: #{_forward_core.1} parent=1 // pred_check_branch
      %47 = sbr.rel (0) target = $region25
    $region24: #{_forward_core.1} parent=1 // pred_region
      _
    $region25: #{_forward_core.1} parent=1 // pred_fallthru
      _
    // Predicated region
    $region26: #{_forward_core.1} parent=1 // pred_check
      _
    $region27: #{_forward_core.1} parent=1 // pred_check_branch
      %49 = sbr.rel (0) target = $region29
    $region28: #{_forward_core.1} parent=1 // pred_region
      _
    $region29: #{_forward_core.1} parent=1 // pred_fallthru
      _
    // Predicated region
    $region30: #{_forward_core.1} parent=1 // pred_check
      _
    $region31: #{_forward_core.1} parent=1 // pred_check_branch
      %51 = sbr.rel (0) target = $region33
    $region32: #{_forward_core.1} parent=1 // pred_region
      _
    $region33: #{_forward_core.1} parent=1 // pred_fallthru
      _
    // Predicated region
    $region34: #{_forward_core.1} parent=1 // pred_check
      _
    $region35: #{_forward_core.1} parent=1 // pred_check_branch
      %53 = sbr.rel (0) target = $region37
    $region36: #{_forward_core.1} parent=1 // pred_region
      _
    $region37: #{_forward_core.1} parent=1 // pred_fallthru
      _
    // Predicated region
    $region38: #{_forward_core.1} parent=1 // pred_check
      _
    $region39: #{_forward_core.1} parent=1 // pred_check_branch
      %55 = sbr.rel (0) target = $region41
    $region40: #{_forward_core.1} parent=1 // pred_region
      %56 = dma.done [#allocation3], 16384
    $region41: #{_forward_core.1} parent=1 // pred_fallthru
      _
    // Predicated region
    $region42: #{_forward_core.1} parent=1 // pred_check
      _
    $region43: #{_forward_core.1} parent=1 // pred_check_branch
      %58 = sbr.rel (0) target = $region45
    $region44: #{_forward_core.1} parent=1 // pred_region
      %59 = dma.done [#allocation5], 32768
    $region45: #{_forward_core.1} parent=1 // pred_fallthru
      _
    %v61 = vld [vmem:[%s0] sm:$0xff]
    %v62 = vld [vmem:[%s0 + $0x8] sm:$0xff]
    %v63 = vpack.c.bf16 %v61, %v61
    %v64 = vpack.c.bf16 %v62, %v62
    %v65 = vld [vmem:[#allocation2] sm:$0xff]
    %v66 = vld [vmem:[#allocation2 + $0x8] sm:$0xff]
    %v67 = vld [vmem:[#allocation2 + $0x10] sm:$0xff]
    %v68 = vld [vmem:[#allocation2 + $0x18] sm:$0xff]
    %v69 = vld [vmem:[#allocation2 + $0x20] sm:$0xff]
    %v70 = vld [vmem:[#allocation2 + $0x28] sm:$0xff]
    %v71 = vld [vmem:[#allocation2 + $0x30] sm:$0xff]
    %v72 = vld [vmem:[#allocation2 + $0x38] sm:$0xff]
    %v73 = vld [vmem:[#allocation2 + $0x40] sm:$0xff]
    %v74 = vld [vmem:[#allocation2 + $0x48] sm:$0xff]
    %v75 = vld [vmem:[#allocation2 + $0x50] sm:$0xff]
    %v76 = vld [vmem:[#allocation2 + $0x58] sm:$0xff]
    %v77 = vld [vmem:[#allocation2 + $0x60] sm:$0xff]
    %v78 = vld [vmem:[#allocation2 + $0x68] sm:$0xff]
    %v79 = vld [vmem:[#allocation2 + $0x70] sm:$0xff]
    %v80 = vld [vmem:[#allocation2 + $0x78] sm:$0xff]
    %v81 = vld [vmem:[#allocation2 + $0x80] sm:$0xff]
    %v82 = vld [vmem:[#allocation2 + $0x88] sm:$0xff]
    %v83 = vld [vmem:[#allocation2 + $0x90] sm:$0xff]
    %v84 = vld [vmem:[#allocation2 + $0x98] sm:$0xff]
    %v85 = vld [vmem:[#allocation2 + $0xa0] sm:$0xff]
    %v86 = vld [vmem:[#allocation2 + $0xa8] sm:$0xff]
    %v87 = vld [vmem:[#allocation2 + $0xb0] sm:$0xff]
    %v88 = vld [vmem:[#allocation2 + $0xb8] sm:$0xff]
    %v89 = vld [vmem:[#allocation2 + $0xc0] sm:$0xff]
    %v90 = vld [vmem:[#allocation2 + $0xc8] sm:$0xff]
    %v91 = vld [vmem:[#allocation2 + $0xd0] sm:$0xff]
    %v92 = vld [vmem:[#allocation2 + $0xd8] sm:$0xff]
    %v93 = vld [vmem:[#allocation2 + $0xe0] sm:$0xff]
    %v94 = vld [vmem:[#allocation2 + $0xe8] sm:$0xff]
    %v95 = vld [vmem:[#allocation2 + $0xf0] sm:$0xff]
    %v96 = vld [vmem:[#allocation2 + $0xf8] sm:$0xff]
    %v97 = vld [vmem:[#allocation2 + $0x100] sm:$0xff]
    %v98 = vld [vmem:[#allocation2 + $0x108] sm:$0xff]
    %v99 = vld [vmem:[#allocation2 + $0x110] sm:$0xff]
    %v100 = vld [vmem:[#allocation2 + $0x118] sm:$0xff]
    %v101 = vld [vmem:[#allocation2 + $0x120] sm:$0xff]
    %v102 = vld [vmem:[#allocation2 + $0x128] sm:$0xff]
    %v103 = vld [vmem:[#allocation2 + $0x130] sm:$0xff]
    %v104 = vld [vmem:[#allocation2 + $0x138] sm:$0xff]
    %v105 = vld [vmem:[#allocation2 + $0x140] sm:$0xff]
    %v106 = vld [vmem:[#allocation2 + $0x148] sm:$0xff]
    %v107 = vld [vmem:[#allocation2 + $0x150] sm:$0xff]
    %v108 = vld [vmem:[#allocation2 + $0x158] sm:$0xff]
    %v109 = vld [vmem:[#allocation2 + $0x160] sm:$0xff]
    %v110 = vld [vmem:[#allocation2 + $0x168] sm:$0xff]
    %v111 = vld [vmem:[#allocation2 + $0x170] sm:$0xff]
    %v112 = vld [vmem:[#allocation2 + $0x178] sm:$0xff]
    %v113 = vld [vmem:[#allocation2 + $0x180] sm:$0xff]
    %v114 = vld [vmem:[#allocation2 + $0x188] sm:$0xff]
    %v115 = vld [vmem:[#allocation2 + $0x190] sm:$0xff]
    %v116 = vld [vmem:[#allocation2 + $0x198] sm:$0xff]
    %v117 = vld [vmem:[#allocation2 + $0x1a0] sm:$0xff]
    %v118 = vld [vmem:[#allocation2 + $0x1a8] sm:$0xff]
    %v119 = vld [vmem:[#allocation2 + $0x1b0] sm:$0xff]
    %v120 = vld [vmem:[#allocation2 + $0x1b8] sm:$0xff]
    %v121 = vld [vmem:[#allocation2 + $0x1c0] sm:$0xff]
    %v122 = vld [vmem:[#allocation2 + $0x1c8] sm:$0xff]
    %v123 = vld [vmem:[#allocation2 + $0x1d0] sm:$0xff]
    %v124 = vld [vmem:[#allocation2 + $0x1d8] sm:$0xff]
    %v125 = vld [vmem:[#allocation2 + $0x1e0] sm:$0xff]
    %v126 = vld [vmem:[#allocation2 + $0x1e8] sm:$0xff]
    %v127 = vld [vmem:[#allocation2 + $0x1f0] sm:$0xff]
    %v128 = vld [vmem:[#allocation2 + $0x1f8] sm:$0xff]
    %v129 = vld [vmem:[#allocation2 + $0x200] sm:$0xff]
    %v130 = vld [vmem:[#allocation2 + $0x208] sm:$0xff]
    %v131 = vld [vmem:[#allocation2 + $0x210] sm:$0xff]
    %v132 = vld [vmem:[#allocation2 + $0x218] sm:$0xff]
    %v133 = vld [vmem:[#allocation2 + $0x220] sm:$0xff]
    %v134 = vld [vmem:[#allocation2 + $0x228] sm:$0xff]
    %v135 = vld [vmem:[#allocation2 + $0x230] sm:$0xff]
    %v136 = vld [vmem:[#allocation2 + $0x238] sm:$0xff]
    %v137 = vld [vmem:[#allocation2 + $0x240] sm:$0xff]
    %v138 = vld [vmem:[#allocation2 + $0x248] sm:$0xff]
    %v139 = vld [vmem:[#allocation2 + $0x250] sm:$0xff]
    %v140 = vld [vmem:[#allocation2 + $0x258] sm:$0xff]
    %v141 = vld [vmem:[#allocation2 + $0x260] sm:$0xff]
    %v142 = vld [vmem:[#allocation2 + $0x268] sm:$0xff]
    %v143 = vld [vmem:[#allocation2 + $0x270] sm:$0xff]
    %v144 = vld [vmem:[#allocation2 + $0x278] sm:$0xff]
    %v145 = vld [vmem:[#allocation2 + $0x280] sm:$0xff]
    %v146 = vld [vmem:[#allocation2 + $0x288] sm:$0xff]
    %v147 = vld [vmem:[#allocation2 + $0x290] sm:$0xff]
    %v148 = vld [vmem:[#allocation2 + $0x298] sm:$0xff]
    %v149 = vld [vmem:[#allocation2 + $0x2a0] sm:$0xff]
    %v150 = vld [vmem:[#allocation2 + $0x2a8] sm:$0xff]
    %v151 = vld [vmem:[#allocation2 + $0x2b0] sm:$0xff]
    %v152 = vld [vmem:[#allocation2 + $0x2b8] sm:$0xff]
    %v153 = vld [vmem:[#allocation2 + $0x2c0] sm:$0xff]
    %v154 = vld [vmem:[#allocation2 + $0x2c8] sm:$0xff]
    %v155 = vld [vmem:[#allocation2 + $0x2d0] sm:$0xff]
    %v156 = vld [vmem:[#allocation2 + $0x2d8] sm:$0xff]
    %v157 = vld [vmem:[#allocation2 + $0x2e0] sm:$0xff]
    %v158 = vld [vmem:[#allocation2 + $0x2e8] sm:$0xff]
    %v159 = vld [vmem:[#allocation2 + $0x2f0] sm:$0xff]
    %v160 = vld [vmem:[#allocation2 + $0x2f8] sm:$0xff]
    %v161 = vld [vmem:[#allocation2 + $0x300] sm:$0xff]
    %v162 = vld [vmem:[#allocation2 + $0x308] sm:$0xff]
    %v163 = vld [vmem:[#allocation2 + $0x310] sm:$0xff]
    %v164 = vld [vmem:[#allocation2 + $0x318] sm:$0xff]
    %v165 = vld [vmem:[#allocation2 + $0x320] sm:$0xff]
    %v166 = vld [vmem:[#allocation2 + $0x328] sm:$0xff]
    %v167 = vld [vmem:[#allocation2 + $0x330] sm:$0xff]
    %v168 = vld [vmem:[#allocation2 + $0x338] sm:$0xff]
    %v169 = vld [vmem:[#allocation2 + $0x340] sm:$0xff]
    %v170 = vld [vmem:[#allocation2 + $0x348] sm:$0xff]
    %v171 = vld [vmem:[#allocation2 + $0x350] sm:$0xff]
    %v172 = vld [vmem:[#allocation2 + $0x358] sm:$0xff]
    %v173 = vld [vmem:[#allocation2 + $0x360] sm:$0xff]
    %v174 = vld [vmem:[#allocation2 + $0x368] sm:$0xff]
    %v175 = vld [vmem:[#allocation2 + $0x370] sm:$0xff]
    %v176 = vld [vmem:[#allocation2 + $0x378] sm:$0xff]
    %v177 = vld [vmem:[#allocation2 + $0x380] sm:$0xff]
    %v178 = vld [vmem:[#allocation2 + $0x388] sm:$0xff]
    %v179 = vld [vmem:[#allocation2 + $0x390] sm:$0xff]
    %v180 = vld [vmem:[#allocation2 + $0x398] sm:$0xff]
    %v181 = vld [vmem:[#allocation2 + $0x3a0] sm:$0xff]
    %v182 = vld [vmem:[#allocation2 + $0x3a8] sm:$0xff]
    %v183 = vld [vmem:[#allocation2 + $0x3b0] sm:$0xff]
    %v184 = vld [vmem:[#allocation2 + $0x3b8] sm:$0xff]
    %v185 = vld [vmem:[#allocation2 + $0x3c0] sm:$0xff]
    %v186 = vld [vmem:[#allocation2 + $0x3c8] sm:$0xff]
    %v187 = vld [vmem:[#allocation2 + $0x3d0] sm:$0xff]
    %v188 = vld [vmem:[#allocation2 + $0x3d8] sm:$0xff]
    %v189 = vld [vmem:[#allocation2 + $0x3e0] sm:$0xff]
    %v190 = vld [vmem:[#allocation2 + $0x3e8] sm:$0xff]
    %v191 = vld [vmem:[#allocation2 + $0x3f0] sm:$0xff]
    %v192 = vld [vmem:[#allocation2 + $0x3f8] sm:$0xff]
    %v193 = vld [vmem:[%s3] sm:$0xff]
    %v195 = vlaneseq
    %v196 = vshrl.u32 %v195, 7
    %v197 = vsub.s32 0, %v196
    %v198 = vrot.slane %v193, %v197
    %v199 = vlaneseq
    %v200 = vshrl.u32 %v199, 7
    %v201 = vsub.s32 1, %v200
    %v202 = vrot.slane %v193, %v201
    %v203 = vlaneseq
    %v204 = vshrl.u32 %v203, 7
    %v205 = vsub.s32 2, %v204
    %v206 = vrot.slane %v193, %v205
    %v207 = vlaneseq
    %v208 = vshrl.u32 %v207, 7
    %v209 = vsub.s32 3, %v208
    %v210 = vrot.slane %v193, %v209
    %v211 = vlaneseq
    %v212 = vshrl.u32 %v211, 7
    %v213 = vsub.s32 4, %v212
    %v214 = vrot.slane %v193, %v213
    %v215 = vlaneseq
    %v216 = vshrl.u32 %v215, 7
    %v217 = vsub.s32 5, %v216
    %v218 = vrot.slane %v193, %v217
    %v219 = vlaneseq
    %v220 = vshrl.u32 %v219, 7
    %v221 = vsub.s32 6, %v220
    %v222 = vrot.slane %v193, %v221
    %v223 = vlaneseq
    %v224 = vshrl.u32 %v223, 7
    %v225 = vsub.s32 7, %v224
    %v226 = vrot.slane %v193, %v225
    %v363 = vunpack.c.l.b16 %v65
    %v364 = vunpack.c.h.b16 %v65
    %v365 = vunpack.c.l.b16 %v66
    %v366 = vunpack.c.h.b16 %v66
    %v367 = vunpack.c.l.b16 %v67
    %v368 = vunpack.c.h.b16 %v67
    %v369 = vunpack.c.l.b16 %v68
    %v370 = vunpack.c.h.b16 %v68
    %v371 = vunpack.c.l.b16 %v69
    %v372 = vunpack.c.h.b16 %v69
    %v373 = vunpack.c.l.b16 %v70
    %v374 = vunpack.c.h.b16 %v70
    %v375 = vunpack.c.l.b16 %v71
    %v376 = vunpack.c.h.b16 %v71
    %v377 = vunpack.c.l.b16 %v72
    %v378 = vunpack.c.h.b16 %v72
    %v379 = vunpack.c.l.b16 %v73
    %v380 = vunpack.c.h.b16 %v73
    %v381 = vunpack.c.l.b16 %v74
    %v382 = vunpack.c.h.b16 %v74
    %v383 = vunpack.c.l.b16 %v75
    %v384 = vunpack.c.h.b16 %v75
    %v385 = vunpack.c.l.b16 %v76
    %v386 = vunpack.c.h.b16 %v76
    %v387 = vunpack.c.l.b16 %v77
    %v388 = vunpack.c.h.b16 %v77
    %v389 = vunpack.c.l.b16 %v78
    %v390 = vunpack.c.h.b16 %v78
    %v391 = vunpack.c.l.b16 %v79
    %v392 = vunpack.c.h.b16 %v79
    %v393 = vunpack.c.l.b16 %v80
    %v394 = vunpack.c.h.b16 %v80
    %v395 = vunpack.c.l.b16 %v81
    %v396 = vunpack.c.h.b16 %v81
    %v397 = vunpack.c.l.b16 %v82
    %v398 = vunpack.c.h.b16 %v82
    %v399 = vunpack.c.l.b16 %v83
    %v400 = vunpack.c.h.b16 %v83
    %v401 = vunpack.c.l.b16 %v84
    %v402 = vunpack.c.h.b16 %v84
    %v403 = vunpack.c.l.b16 %v85
    %v404 = vunpack.c.h.b16 %v85
    %v405 = vunpack.c.l.b16 %v86
    %v406 = vunpack.c.h.b16 %v86
    %v407 = vunpack.c.l.b16 %v87
    %v408 = vunpack.c.h.b16 %v87
    %v409 = vunpack.c.l.b16 %v88
    %v410 = vunpack.c.h.b16 %v88
    %v411 = vunpack.c.l.b16 %v89
    %v412 = vunpack.c.h.b16 %v89
    %v413 = vunpack.c.l.b16 %v90
    %v414 = vunpack.c.h.b16 %v90
    %v415 = vunpack.c.l.b16 %v91
    %v416 = vunpack.c.h.b16 %v91
    %v417 = vunpack.c.l.b16 %v92
    %v418 = vunpack.c.h.b16 %v92
    %v419 = vunpack.c.l.b16 %v93
    %v420 = vunpack.c.h.b16 %v93
    %v421 = vunpack.c.l.b16 %v94
    %v422 = vunpack.c.h.b16 %v94
    %v423 = vunpack.c.l.b16 %v95
    %v424 = vunpack.c.h.b16 %v95
    %v425 = vunpack.c.l.b16 %v96
    %v426 = vunpack.c.h.b16 %v96
    %v427 = vunpack.c.l.b16 %v97
    %v428 = vunpack.c.h.b16 %v97
    %v429 = vunpack.c.l.b16 %v98
    %v430 = vunpack.c.h.b16 %v98
    %v431 = vunpack.c.l.b16 %v99
    %v432 = vunpack.c.h.b16 %v99
    %v433 = vunpack.c.l.b16 %v100
    %v434 = vunpack.c.h.b16 %v100
    %v435 = vunpack.c.l.b16 %v101
    %v436 = vunpack.c.h.b16 %v101
    %v437 = vunpack.c.l.b16 %v102
    %v438 = vunpack.c.h.b16 %v102
    %v439 = vunpack.c.l.b16 %v103
    %v440 = vunpack.c.h.b16 %v103
    %v441 = vunpack.c.l.b16 %v104
    %v442 = vunpack.c.h.b16 %v104
    %v443 = vunpack.c.l.b16 %v105
    %v444 = vunpack.c.h.b16 %v105
    %v445 = vunpack.c.l.b16 %v106
    %v446 = vunpack.c.h.b16 %v106
    %v447 = vunpack.c.l.b16 %v107
    %v448 = vunpack.c.h.b16 %v107
    %v449 = vunpack.c.l.b16 %v108
    %v450 = vunpack.c.h.b16 %v108
    %v451 = vunpack.c.l.b16 %v109
    %v452 = vunpack.c.h.b16 %v109
    %v453 = vunpack.c.l.b16 %v110
    %v454 = vunpack.c.h.b16 %v110
    %v455 = vunpack.c.l.b16 %v111
    %v456 = vunpack.c.h.b16 %v111
    %v457 = vunpack.c.l.b16 %v112
    %v458 = vunpack.c.h.b16 %v112
    %v459 = vunpack.c.l.b16 %v113
    %v460 = vunpack.c.h.b16 %v113
    %v461 = vunpack.c.l.b16 %v114
    %v462 = vunpack.c.h.b16 %v114
    %v463 = vunpack.c.l.b16 %v115
    %v464 = vunpack.c.h.b16 %v115
    %v465 = vunpack.c.l.b16 %v116
    %v466 = vunpack.c.h.b16 %v116
    %v467 = vunpack.c.l.b16 %v117
    %v468 = vunpack.c.h.b16 %v117
    %v469 = vunpack.c.l.b16 %v118
    %v470 = vunpack.c.h.b16 %v118
    %v471 = vunpack.c.l.b16 %v119
    %v472 = vunpack.c.h.b16 %v119
    %v473 = vunpack.c.l.b16 %v120
    %v474 = vunpack.c.h.b16 %v120
    %v475 = vunpack.c.l.b16 %v121
    %v476 = vunpack.c.h.b16 %v121
    %v477 = vunpack.c.l.b16 %v122
    %v478 = vunpack.c.h.b16 %v122
    %v479 = vunpack.c.l.b16 %v123
    %v480 = vunpack.c.h.b16 %v123
    %v481 = vunpack.c.l.b16 %v124
    %v482 = vunpack.c.h.b16 %v124
    %v483 = vunpack.c.l.b16 %v125
    %v484 = vunpack.c.h.b16 %v125
    %v485 = vunpack.c.l.b16 %v126
    %v486 = vunpack.c.h.b16 %v126
    %v487 = vunpack.c.l.b16 %v127
    %v488 = vunpack.c.h.b16 %v127
    %v489 = vunpack.c.l.b16 %v128
    %v490 = vunpack.c.h.b16 %v128
    %v491 = vunpack.c.l.b16 %v129
    %v492 = vunpack.c.h.b16 %v129
    %v493 = vunpack.c.l.b16 %v130
    %v494 = vunpack.c.h.b16 %v130
    %v495 = vunpack.c.l.b16 %v131
    %v496 = vunpack.c.h.b16 %v131
    %v497 = vunpack.c.l.b16 %v132
    %v498 = vunpack.c.h.b16 %v132
    %v499 = vunpack.c.l.b16 %v133
    %v500 = vunpack.c.h.b16 %v133
    %v501 = vunpack.c.l.b16 %v134
    %v502 = vunpack.c.h.b16 %v134
    %v503 = vunpack.c.l.b16 %v135
    %v504 = vunpack.c.h.b16 %v135
    %v505 = vunpack.c.l.b16 %v136
    %v506 = vunpack.c.h.b16 %v136
    %v507 = vunpack.c.l.b16 %v137
    %v508 = vunpack.c.h.b16 %v137
    %v509 = vunpack.c.l.b16 %v138
    %v510 = vunpack.c.h.b16 %v138
    %v511 = vunpack.c.l.b16 %v139
    %v512 = vunpack.c.h.b16 %v139
    %v513 = vunpack.c.l.b16 %v140
    %v514 = vunpack.c.h.b16 %v140
    %v515 = vunpack.c.l.b16 %v141
    %v516 = vunpack.c.h.b16 %v141
    %v517 = vunpack.c.l.b16 %v142
    %v518 = vunpack.c.h.b16 %v142
    %v519 = vunpack.c.l.b16 %v143
    %v520 = vunpack.c.h.b16 %v143
    %v521 = vunpack.c.l.b16 %v144
    %v522 = vunpack.c.h.b16 %v144
    %v523 = vunpack.c.l.b16 %v145
    %v524 = vunpack.c.h.b16 %v145
    %v525 = vunpack.c.l.b16 %v146
    %v526 = vunpack.c.h.b16 %v146
    %v527 = vunpack.c.l.b16 %v147
    %v528 = vunpack.c.h.b16 %v147
    %v529 = vunpack.c.l.b16 %v148
    %v530 = vunpack.c.h.b16 %v148
    %v531 = vunpack.c.l.b16 %v149
    %v532 = vunpack.c.h.b16 %v149
    %v533 = vunpack.c.l.b16 %v150
    %v534 = vunpack.c.h.b16 %v150
    %v535 = vunpack.c.l.b16 %v151
    %v536 = vunpack.c.h.b16 %v151
    %v537 = vunpack.c.l.b16 %v152
    %v538 = vunpack.c.h.b16 %v152
    %v539 = vunpack.c.l.b16 %v153
    %v540 = vunpack.c.h.b16 %v153
    %v541 = vunpack.c.l.b16 %v154
    %v542 = vunpack.c.h.b16 %v154
    %v543 = vunpack.c.l.b16 %v155
    %v544 = vunpack.c.h.b16 %v155
    %v545 = vunpack.c.l.b16 %v156
    %v546 = vunpack.c.h.b16 %v156
    %v547 = vunpack.c.l.b16 %v157
    %v548 = vunpack.c.h.b16 %v157
    %v549 = vunpack.c.l.b16 %v158
    %v550 = vunpack.c.h.b16 %v158
    %v551 = vunpack.c.l.b16 %v159
    %v552 = vunpack.c.h.b16 %v159
    %v553 = vunpack.c.l.b16 %v160
    %v554 = vunpack.c.h.b16 %v160
    %v555 = vunpack.c.l.b16 %v161
    %v556 = vunpack.c.h.b16 %v161
    %v557 = vunpack.c.l.b16 %v162
    %v558 = vunpack.c.h.b16 %v162
    %v559 = vunpack.c.l.b16 %v163
    %v560 = vunpack.c.h.b16 %v163
    %v561 = vunpack.c.l.b16 %v164
    %v562 = vunpack.c.h.b16 %v164
    %v563 = vunpack.c.l.b16 %v165
    %v564 = vunpack.c.h.b16 %v165
    %v565 = vunpack.c.l.b16 %v166
    %v566 = vunpack.c.h.b16 %v166
    %v567 = vunpack.c.l.b16 %v167
    %v568 = vunpack.c.h.b16 %v167
    %v569 = vunpack.c.l.b16 %v168
    %v570 = vunpack.c.h.b16 %v168
    %v571 = vunpack.c.l.b16 %v169
    %v572 = vunpack.c.h.b16 %v169
    %v573 = vunpack.c.l.b16 %v170
    %v574 = vunpack.c.h.b16 %v170
    %v575 = vunpack.c.l.b16 %v171
    %v576 = vunpack.c.h.b16 %v171
    %v577 = vunpack.c.l.b16 %v172
    %v578 = vunpack.c.h.b16 %v172
    %v579 = vunpack.c.l.b16 %v173
    %v580 = vunpack.c.h.b16 %v173
    %v581 = vunpack.c.l.b16 %v174
    %v582 = vunpack.c.h.b16 %v174
    %v583 = vunpack.c.l.b16 %v175
    %v584 = vunpack.c.h.b16 %v175
    %v585 = vunpack.c.l.b16 %v176
    %v586 = vunpack.c.h.b16 %v176
    %v587 = vunpack.c.l.b16 %v177
    %v588 = vunpack.c.h.b16 %v177
    %v589 = vunpack.c.l.b16 %v178
    %v590 = vunpack.c.h.b16 %v178
    %v591 = vunpack.c.l.b16 %v179
    %v592 = vunpack.c.h.b16 %v179
    %v593 = vunpack.c.l.b16 %v180
    %v594 = vunpack.c.h.b16 %v180
    %v595 = vunpack.c.l.b16 %v181
    %v596 = vunpack.c.h.b16 %v181
    %v597 = vunpack.c.l.b16 %v182
    %v598 = vunpack.c.h.b16 %v182
    %v599 = vunpack.c.l.b16 %v183
    %v600 = vunpack.c.h.b16 %v183
    %v601 = vunpack.c.l.b16 %v184
    %v602 = vunpack.c.h.b16 %v184
    %v603 = vunpack.c.l.b16 %v185
    %v604 = vunpack.c.h.b16 %v185
    %v605 = vunpack.c.l.b16 %v186
    %v606 = vunpack.c.h.b16 %v186
    %v607 = vunpack.c.l.b16 %v187
    %v608 = vunpack.c.h.b16 %v187
    %v609 = vunpack.c.l.b16 %v188
    %v610 = vunpack.c.h.b16 %v188
    %v611 = vunpack.c.l.b16 %v189
    %v612 = vunpack.c.h.b16 %v189
    %v613 = vunpack.c.l.b16 %v190
    %v614 = vunpack.c.h.b16 %v190
    %v615 = vunpack.c.l.b16 %v191
    %v616 = vunpack.c.h.b16 %v191
    %v617 = vunpack.c.l.b16 %v192
    %v618 = vunpack.c.h.b16 %v192
    %v619 = vpack.c.b16 %v371, %v363
    %v620 = vpack.c.b16 %v372, %v364
    %v621 = vpack.c.b16 %v373, %v365
    %v622 = vpack.c.b16 %v374, %v366
    %v623 = vpack.c.b16 %v375, %v367
    %v624 = vpack.c.b16 %v376, %v368
    %v625 = vpack.c.b16 %v377, %v369
    %v626 = vpack.c.b16 %v378, %v370
    %v627 = vpack.c.b16 %v387, %v379
    %v628 = vpack.c.b16 %v388, %v380
    %v629 = vpack.c.b16 %v389, %v381
    %v630 = vpack.c.b16 %v390, %v382
    %v631 = vpack.c.b16 %v391, %v383
    %v632 = vpack.c.b16 %v392, %v384
    %v633 = vpack.c.b16 %v393, %v385
    %v634 = vpack.c.b16 %v394, %v386
    %v635 = vpack.c.b16 %v403, %v395
    %v636 = vpack.c.b16 %v404, %v396
    %v637 = vpack.c.b16 %v405, %v397
    %v638 = vpack.c.b16 %v406, %v398
    %v639 = vpack.c.b16 %v407, %v399
    %v640 = vpack.c.b16 %v408, %v400
    %v641 = vpack.c.b16 %v409, %v401
    %v642 = vpack.c.b16 %v410, %v402
    %v643 = vpack.c.b16 %v419, %v411
    %v644 = vpack.c.b16 %v420, %v412
    %v645 = vpack.c.b16 %v421, %v413
    %v646 = vpack.c.b16 %v422, %v414
    %v647 = vpack.c.b16 %v423, %v415
    %v648 = vpack.c.b16 %v424, %v416
    %v649 = vpack.c.b16 %v425, %v417
    %v650 = vpack.c.b16 %v426, %v418
    %v651 = vpack.c.b16 %v435, %v427
    %v652 = vpack.c.b16 %v436, %v428
    %v653 = vpack.c.b16 %v437, %v429
    %v654 = vpack.c.b16 %v438, %v430
    %v655 = vpack.c.b16 %v439, %v431
    %v656 = vpack.c.b16 %v440, %v432
    %v657 = vpack.c.b16 %v441, %v433
    %v658 = vpack.c.b16 %v442, %v434
    %v659 = vpack.c.b16 %v451, %v443
    %v660 = vpack.c.b16 %v452, %v444
    %v661 = vpack.c.b16 %v453, %v445
    %v662 = vpack.c.b16 %v454, %v446
    %v663 = vpack.c.b16 %v455, %v447
    %v664 = vpack.c.b16 %v456, %v448
    %v665 = vpack.c.b16 %v457, %v449
    %v666 = vpack.c.b16 %v458, %v450
    %v667 = vpack.c.b16 %v467, %v459
    %v668 = vpack.c.b16 %v468, %v460
    %v669 = vpack.c.b16 %v469, %v461
    %v670 = vpack.c.b16 %v470, %v462
    %v671 = vpack.c.b16 %v471, %v463
    %v672 = vpack.c.b16 %v472, %v464
    %v673 = vpack.c.b16 %v473, %v465
    %v674 = vpack.c.b16 %v474, %v466
    %v675 = vpack.c.b16 %v483, %v475
    %v676 = vpack.c.b16 %v484, %v476
    %v677 = vpack.c.b16 %v485, %v477
    %v678 = vpack.c.b16 %v486, %v478
    %v679 = vpack.c.b16 %v487, %v479
    %v680 = vpack.c.b16 %v488, %v480
    %v681 = vpack.c.b16 %v489, %v481
    %v682 = vpack.c.b16 %v490, %v482
    %v683 = vpack.c.b16 %v499, %v491
    %v684 = vpack.c.b16 %v500, %v492
    %v685 = vpack.c.b16 %v501, %v493
    %v686 = vpack.c.b16 %v502, %v494
    %v687 = vpack.c.b16 %v503, %v495
    %v688 = vpack.c.b16 %v504, %v496
    %v689 = vpack.c.b16 %v505, %v497
    %v690 = vpack.c.b16 %v506, %v498
    %v691 = vpack.c.b16 %v515, %v507
    %v692 = vpack.c.b16 %v516, %v508
    %v693 = vpack.c.b16 %v517, %v509
    %v694 = vpack.c.b16 %v518, %v510
    %v695 = vpack.c.b16 %v519, %v511
    %v696 = vpack.c.b16 %v520, %v512
    %v697 = vpack.c.b16 %v521, %v513
    %v698 = vpack.c.b16 %v522, %v514
    %v699 = vpack.c.b16 %v531, %v523
    %v700 = vpack.c.b16 %v532, %v524
    %v701 = vpack.c.b16 %v533, %v525
    %v702 = vpack.c.b16 %v534, %v526
    %v703 = vpack.c.b16 %v535, %v527
    %v704 = vpack.c.b16 %v536, %v528
    %v705 = vpack.c.b16 %v537, %v529
    %v706 = vpack.c.b16 %v538, %v530
    %v707 = vpack.c.b16 %v547, %v539
    %v708 = vpack.c.b16 %v548, %v540
    %v709 = vpack.c.b16 %v549, %v541
    %v710 = vpack.c.b16 %v550, %v542
    %v711 = vpack.c.b16 %v551, %v543
    %v712 = vpack.c.b16 %v552, %v544
    %v713 = vpack.c.b16 %v553, %v545
    %v714 = vpack.c.b16 %v554, %v546
    %v715 = vpack.c.b16 %v563, %v555
    %v716 = vpack.c.b16 %v564, %v556
    %v717 = vpack.c.b16 %v565, %v557
    %v718 = vpack.c.b16 %v566, %v558
    %v719 = vpack.c.b16 %v567, %v559
    %v720 = vpack.c.b16 %v568, %v560
    %v721 = vpack.c.b16 %v569, %v561
    %v722 = vpack.c.b16 %v570, %v562
    %v723 = vpack.c.b16 %v579, %v571
    %v724 = vpack.c.b16 %v580, %v572
    %v725 = vpack.c.b16 %v581, %v573
    %v726 = vpack.c.b16 %v582, %v574
    %v727 = vpack.c.b16 %v583, %v575
    %v728 = vpack.c.b16 %v584, %v576
    %v729 = vpack.c.b16 %v585, %v577
    %v730 = vpack.c.b16 %v586, %v578
    %v731 = vpack.c.b16 %v595, %v587
    %v732 = vpack.c.b16 %v596, %v588
    %v733 = vpack.c.b16 %v597, %v589
    %v734 = vpack.c.b16 %v598, %v590
    %v735 = vpack.c.b16 %v599, %v591
    %v736 = vpack.c.b16 %v600, %v592
    %v737 = vpack.c.b16 %v601, %v593
    %v738 = vpack.c.b16 %v602, %v594
    %v739 = vpack.c.b16 %v611, %v603
    %v740 = vpack.c.b16 %v612, %v604
    %v741 = vpack.c.b16 %v613, %v605
    %v742 = vpack.c.b16 %v614, %v606
    %v743 = vpack.c.b16 %v615, %v607
    %v744 = vpack.c.b16 %v616, %v608
    %v745 = vpack.c.b16 %v617, %v609
    %v746 = vpack.c.b16 %v618, %v610
    %875 = vmatprep.subr.bf16.mxu0 %v620
    %876 = vmatpush1.bf16.msra.mxu0 %v619
    %877 = vmatprep.subr.bf16.mxu0 %v628
    %878 = vmatpush1.bf16.msra.mxu0 %v627
    %879 = vmatprep.subr.bf16.mxu0 %v636
    %880 = vmatpush1.bf16.msra.mxu0 %v635
    %881 = vmatprep.subr.bf16.mxu0 %v644
    %882 = vmatpush1.bf16.msra.mxu0 %v643
    %883 = vmatprep.subr.bf16.mxu0 %v652
    %884 = vmatpush1.bf16.msra.mxu0 %v651
    %885 = vmatprep.subr.bf16.mxu0 %v660
    %886 = vmatpush1.bf16.msra.mxu0 %v659
    %887 = vmatprep.subr.bf16.mxu0 %v668
    %888 = vmatpush1.bf16.msra.mxu0 %v667
    %889 = vmatprep.subr.bf16.mxu0 %v676
    %890 = vmatpush1.bf16.msra.mxu0 %v675
    %891 = vmatprep.subr.bf16.mxu0 %v684
    %892 = vmatpush1.bf16.msra.mxu0 %v683
    %893 = vmatprep.subr.bf16.mxu0 %v692
    %894 = vmatpush1.bf16.msra.mxu0 %v691
    %895 = vmatprep.subr.bf16.mxu0 %v700
    %896 = vmatpush1.bf16.msra.mxu0 %v699
    %897 = vmatprep.subr.bf16.mxu0 %v708
    %898 = vmatpush1.bf16.msra.mxu0 %v707
    %899 = vmatprep.subr.bf16.mxu0 %v716
    %900 = vmatpush1.bf16.msra.mxu0 %v715
    %901 = vmatprep.subr.bf16.mxu0 %v724
    %902 = vmatpush1.bf16.msra.mxu0 %v723
    %903 = vmatprep.subr.bf16.mxu0 %v732
    %904 = vmatpush1.bf16.msra.mxu0 %v731
    %905 = vmatprep.subr.bf16.mxu0 %v740
    %906 = vmatpush1.bf16.msra.mxu0 %v739
    %907 = vmatprep.mubr.bf16.mxu0 %v64
    %908 = vmatmul.mubr.bf16.gmra.mrb[0].mxu0 %v63
    %v909 = vpop.f32.mrb[0].mxu0
    %v910 = vadd.f32 %v198, %v909
    %v911 = vpop.f32.mrb[0].mxu0
    %v912 = vadd.f32 %v202, %v911
    %v913 = vpop.f32.mrb[0].mxu0
    %v914 = vpop.f32.mrb[0].mxu0
    %915 = vdwg.mxu0
    %916 = vmatprep.subr.bf16.mxu0 %v622
    %917 = vmatpush1.bf16.msra.mxu0 %v621
    %918 = vmatprep.subr.bf16.mxu0 %v630
    %919 = vmatpush1.bf16.msra.mxu0 %v629
    %920 = vmatprep.subr.bf16.mxu0 %v638
    %921 = vmatpush1.bf16.msra.mxu0 %v637
    %922 = vmatprep.subr.bf16.mxu0 %v646
    %923 = vmatpush1.bf16.msra.mxu0 %v645
    %924 = vmatprep.subr.bf16.mxu0 %v654
    %925 = vmatpush1.bf16.msra.mxu0 %v653
    %926 = vmatprep.subr.bf16.mxu0 %v662
    %927 = vmatpush1.bf16.msra.mxu0 %v661
    %928 = vmatprep.subr.bf16.mxu0 %v670
    %929 = vmatpush1.bf16.msra.mxu0 %v669
    %930 = vmatprep.subr.bf16.mxu0 %v678
    %931 = vmatpush1.bf16.msra.mxu0 %v677
    %932 = vmatprep.subr.bf16.mxu0 %v686
    %933 = vmatpush1.bf16.msra.mxu0 %v685
    %934 = vmatprep.subr.bf16.mxu0 %v694
    %935 = vmatpush1.bf16.msra.mxu0 %v693
    %936 = vmatprep.subr.bf16.mxu0 %v702
    %937 = vmatpush1.bf16.msra.mxu0 %v701
    %938 = vmatprep.subr.bf16.mxu0 %v710
    %939 = vmatpush1.bf16.msra.mxu0 %v709
    %940 = vmatprep.subr.bf16.mxu0 %v718
    %941 = vmatpush1.bf16.msra.mxu0 %v717
    %942 = vmatprep.subr.bf16.mxu0 %v726
    %943 = vmatpush1.bf16.msra.mxu0 %v725
    %944 = vmatprep.subr.bf16.mxu0 %v734
    %945 = vmatpush1.bf16.msra.mxu0 %v733
    %946 = vmatprep.subr.bf16.mxu0 %v742
    %947 = vmatpush1.bf16.msra.mxu0 %v741
    %948 = vmatprep.mubr.bf16.mxu0 %v64
    %949 = vmatmul.mubr.bf16.gmra.mrb[0].mxu0 %v63
    %v950 = vpop.f32.mrb[0].mxu0
    %v951 = vadd.f32 %v206, %v950
    %v952 = vpop.f32.mrb[0].mxu0
    %v953 = vadd.f32 %v210, %v952
    %v954 = vpop.f32.mrb[0].mxu0
    %v955 = vpop.f32.mrb[0].mxu0
    %956 = vdwg.mxu0
    %957 = vmatprep.subr.bf16.mxu0 %v624
    %958 = vmatpush1.bf16.msra.mxu0 %v623
    %959 = vmatprep.subr.bf16.mxu0 %v632
    %960 = vmatpush1.bf16.msra.mxu0 %v631
    %961 = vmatprep.subr.bf16.mxu0 %v640
    %962 = vmatpush1.bf16.msra.mxu0 %v639
    %963 = vmatprep.subr.bf16.mxu0 %v648
    %964 = vmatpush1.bf16.msra.mxu0 %v647
    %965 = vmatprep.subr.bf16.mxu0 %v656
    %966 = vmatpush1.bf16.msra.mxu0 %v655
    %967 = vmatprep.subr.bf16.mxu0 %v664
    %968 = vmatpush1.bf16.msra.mxu0 %v663
    %969 = vmatprep.subr.bf16.mxu0 %v672
    %970 = vmatpush1.bf16.msra.mxu0 %v671
    %971 = vmatprep.subr.bf16.mxu0 %v680
    %972 = vmatpush1.bf16.msra.mxu0 %v679
    %973 = vmatprep.subr.bf16.mxu0 %v688
    %974 = vmatpush1.bf16.msra.mxu0 %v687
    %975 = vmatprep.subr.bf16.mxu0 %v696
    %976 = vmatpush1.bf16.msra.mxu0 %v695
    %977 = vmatprep.subr.bf16.mxu0 %v704
    %978 = vmatpush1.bf16.msra.mxu0 %v703
    %979 = vmatprep.subr.bf16.mxu0 %v712
    %980 = vmatpush1.bf16.msra.mxu0 %v711
    %981 = vmatprep.subr.bf16.mxu0 %v720
    %982 = vmatpush1.bf16.msra.mxu0 %v719
    %983 = vmatprep.subr.bf16.mxu0 %v728
    %984 = vmatpush1.bf16.msra.mxu0 %v727
    %985 = vmatprep.subr.bf16.mxu0 %v736
    %986 = vmatpush1.bf16.msra.mxu0 %v735
    %987 = vmatprep.subr.bf16.mxu0 %v744
    %988 = vmatpush1.bf16.msra.mxu0 %v743
    %989 = vmatprep.mubr.bf16.mxu0 %v64
    %990 = vmatmul.mubr.bf16.gmra.mrb[0].mxu0 %v63
    %v991 = vpop.f32.mrb[0].mxu0
    %v992 = vadd.f32 %v214, %v991
    %v993 = vpop.f32.mrb[0].mxu0
    %v994 = vadd.f32 %v218, %v993
    %v995 = vpop.f32.mrb[0].mxu0
    %v996 = vpop.f32.mrb[0].mxu0
    %997 = vdwg.mxu0
    %998 = vmatprep.subr.bf16.mxu0 %v626
    %999 = vmatpush1.bf16.msra.mxu0 %v625
    %1000 = vmatprep.subr.bf16.mxu0 %v634
    %1001 = vmatpush1.bf16.msra.mxu0 %v633
    %1002 = vmatprep.subr.bf16.mxu0 %v642
    %1003 = vmatpush1.bf16.msra.mxu0 %v641
    %1004 = vmatprep.subr.bf16.mxu0 %v650
    %1005 = vmatpush1.bf16.msra.mxu0 %v649
    %1006 = vmatprep.subr.bf16.mxu0 %v658
    %1007 = vmatpush1.bf16.msra.mxu0 %v657
    %1008 = vmatprep.subr.bf16.mxu0 %v666
    %1009 = vmatpush1.bf16.msra.mxu0 %v665
    %1010 = vmatprep.subr.bf16.mxu0 %v674
    %1011 = vmatpush1.bf16.msra.mxu0 %v673
    %1012 = vmatprep.subr.bf16.mxu0 %v682
    %1013 = vmatpush1.bf16.msra.mxu0 %v681
    %1014 = vmatprep.subr.bf16.mxu0 %v690
    %1015 = vmatpush1.bf16.msra.mxu0 %v689
    %1016 = vmatprep.subr.bf16.mxu0 %v698
    %1017 = vmatpush1.bf16.msra.mxu0 %v697
    %1018 = vmatprep.subr.bf16.mxu0 %v706
    %1019 = vmatpush1.bf16.msra.mxu0 %v705
    %1020 = vmatprep.subr.bf16.mxu0 %v714
    %1021 = vmatpush1.bf16.msra.mxu0 %v713
    %1022 = vmatprep.subr.bf16.mxu0 %v722
    %1023 = vmatpush1.bf16.msra.mxu0 %v721
    %1024 = vmatprep.subr.bf16.mxu0 %v730
    %1025 = vmatpush1.bf16.msra.mxu0 %v729
    %1026 = vmatprep.subr.bf16.mxu0 %v738
    %1027 = vmatpush1.bf16.msra.mxu0 %v737
    %1028 = vmatprep.subr.bf16.mxu0 %v746
    %1029 = vmatpush1.bf16.msra.mxu0 %v745
    %1030 = vmatprep.mubr.bf16.mxu0 %v64
    %1031 = vmatmul.mubr.bf16.gmra.mrb[0].mxu0 %v63
    %v1032 = vpop.f32.mrb[0].mxu0
    %v1033 = vadd.f32 %v222, %v1032
    %v1034 = vpop.f32.mrb[0].mxu0
    %v1035 = vadd.f32 %v226, %v1034
    %v1036 = vpop.f32.mrb[0].mxu0
    %v1037 = vpop.f32.mrb[0].mxu0
    %1038 = vdwg.mxu0
    %v1039 = vmax.f32 %v910, 0.0
    %v1040 = vmax.f32 %v912, 0.0
    %v1041 = vmax.f32 %v951, 0.0
    %v1042 = vmax.f32 %v953, 0.0
    %v1043 = vmax.f32 %v992, 0.0
    %v1044 = vmax.f32 %v994, 0.0
    %v1045 = vmax.f32 %v1033, 0.0
    %v1046 = vmax.f32 %v1035, 0.0
    %v1047 = vpack.c.bf16 %v1039, %v1039
    %v1048 = vpack.c.bf16 %v1040, %v1040
    %v1049 = vpack.c.bf16 %v1041, %v1041
    %v1050 = vpack.c.bf16 %v1042, %v1042
    %v1051 = vpack.c.bf16 %v1043, %v1043
    %v1052 = vpack.c.bf16 %v1044, %v1044
    %v1053 = vpack.c.bf16 %v1045, %v1045
    %v1054 = vpack.c.bf16 %v1046, %v1046
    %v1055 = vld [vmem:[#allocation4] sm:$0xff]
    %v1056 = vld [vmem:[#allocation4 + $0x8] sm:$0xff]
    %v1057 = vld [vmem:[#allocation4 + $0x10] sm:$0xff]
    %v1058 = vld [vmem:[#allocation4 + $0x18] sm:$0xff]
    %v1059 = vld [vmem:[#allocation4 + $0x20] sm:$0xff]
    %v1060 = vld [vmem:[#allocation4 + $0x28] sm:$0xff]
    %v1061 = vld [vmem:[#allocation4 + $0x30] sm:$0xff]
    %v1062 = vld [vmem:[#allocation4 + $0x38] sm:$0xff]
    %v1063 = vld [vmem:[#allocation4 + $0x40] sm:$0xff]
    %v1064 = vld [vmem:[#allocation4 + $0x48] sm:$0xff]
    %v1065 = vld [vmem:[#allocation4 + $0x50] sm:$0xff]
    %v1066 = vld [vmem:[#allocation4 + $0x58] sm:$0xff]
    %v1067 = vld [vmem:[#allocation4 + $0x60] sm:$0xff]
    %v1068 = vld [vmem:[#allocation4 + $0x68] sm:$0xff]
    %v1069 = vld [vmem:[#allocation4 + $0x70] sm:$0xff]
    %v1070 = vld [vmem:[#allocation4 + $0x78] sm:$0xff]
    %v1071 = vld [vmem:[#allocation4 + $0x80] sm:$0xff]
    %v1072 = vld [vmem:[#allocation4 + $0x88] sm:$0xff]
    %v1073 = vld [vmem:[#allocation4 + $0x90] sm:$0xff]
    %v1074 = vld [vmem:[#allocation4 + $0x98] sm:$0xff]
    %v1075 = vld [vmem:[#allocation4 + $0xa0] sm:$0xff]
    %v1076 = vld [vmem:[#allocation4 + $0xa8] sm:$0xff]
    %v1077 = vld [vmem:[#allocation4 + $0xb0] sm:$0xff]
    %v1078 = vld [vmem:[#allocation4 + $0xb8] sm:$0xff]
    %v1079 = vld [vmem:[#allocation4 + $0xc0] sm:$0xff]
    %v1080 = vld [vmem:[#allocation4 + $0xc8] sm:$0xff]
    %v1081 = vld [vmem:[#allocation4 + $0xd0] sm:$0xff]
    %v1082 = vld [vmem:[#allocation4 + $0xd8] sm:$0xff]
    %v1083 = vld [vmem:[#allocation4 + $0xe0] sm:$0xff]
    %v1084 = vld [vmem:[#allocation4 + $0xe8] sm:$0xff]
    %v1085 = vld [vmem:[#allocation4 + $0xf0] sm:$0xff]
    %v1086 = vld [vmem:[#allocation4 + $0xf8] sm:$0xff]
    %v1087 = vld [vmem:[#allocation4 + $0x100] sm:$0xff]
    %v1088 = vld [vmem:[#allocation4 + $0x108] sm:$0xff]
    %v1089 = vld [vmem:[#allocation4 + $0x110] sm:$0xff]
    %v1090 = vld [vmem:[#allocation4 + $0x118] sm:$0xff]
    %v1091 = vld [vmem:[#allocation4 + $0x120] sm:$0xff]
    %v1092 = vld [vmem:[#allocation4 + $0x128] sm:$0xff]
    %v1093 = vld [vmem:[#allocation4 + $0x130] sm:$0xff]
    %v1094 = vld [vmem:[#allocation4 + $0x138] sm:$0xff]
    %v1095 = vld [vmem:[#allocation4 + $0x140] sm:$0xff]
    %v1096 = vld [vmem:[#allocation4 + $0x148] sm:$0xff]
    %v1097 = vld [vmem:[#allocation4 + $0x150] sm:$0xff]
    %v1098 = vld [vmem:[#allocation4 + $0x158] sm:$0xff]
    %v1099 = vld [vmem:[#allocation4 + $0x160] sm:$0xff]
    %v1100 = vld [vmem:[#allocation4 + $0x168] sm:$0xff]
    %v1101 = vld [vmem:[#allocation4 + $0x170] sm:$0xff]
    %v1102 = vld [vmem:[#allocation4 + $0x178] sm:$0xff]
    %v1103 = vld [vmem:[#allocation4 + $0x180] sm:$0xff]
    %v1104 = vld [vmem:[#allocation4 + $0x188] sm:$0xff]
    %v1105 = vld [vmem:[#allocation4 + $0x190] sm:$0xff]
    %v1106 = vld [vmem:[#allocation4 + $0x198] sm:$0xff]
    %v1107 = vld [vmem:[#allocation4 + $0x1a0] sm:$0xff]
    %v1108 = vld [vmem:[#allocation4 + $0x1a8] sm:$0xff]
    %v1109 = vld [vmem:[#allocation4 + $0x1b0] sm:$0xff]
    %v1110 = vld [vmem:[#allocation4 + $0x1b8] sm:$0xff]
    %v1111 = vld [vmem:[#allocation4 + $0x1c0] sm:$0xff]
    %v1112 = vld [vmem:[#allocation4 + $0x1c8] sm:$0xff]
    %v1113 = vld [vmem:[#allocation4 + $0x1d0] sm:$0xff]
    %v1114 = vld [vmem:[#allocation4 + $0x1d8] sm:$0xff]
    %v1115 = vld [vmem:[#allocation4 + $0x1e0] sm:$0xff]
    %v1116 = vld [vmem:[#allocation4 + $0x1e8] sm:$0xff]
    %v1117 = vld [vmem:[#allocation4 + $0x1f0] sm:$0xff]
    %v1118 = vld [vmem:[#allocation4 + $0x1f8] sm:$0xff]
    %v1119 = vld [vmem:[#allocation4 + $0x200] sm:$0xff]
    %v1120 = vld [vmem:[#allocation4 + $0x208] sm:$0xff]
    %v1121 = vld [vmem:[#allocation4 + $0x210] sm:$0xff]
    %v1122 = vld [vmem:[#allocation4 + $0x218] sm:$0xff]
    %v1123 = vld [vmem:[#allocation4 + $0x220] sm:$0xff]
    %v1124 = vld [vmem:[#allocation4 + $0x228] sm:$0xff]
    %v1125 = vld [vmem:[#allocation4 + $0x230] sm:$0xff]
    %v1126 = vld [vmem:[#allocation4 + $0x238] sm:$0xff]
    %v1127 = vld [vmem:[#allocation4 + $0x240] sm:$0xff]
    %v1128 = vld [vmem:[#allocation4 + $0x248] sm:$0xff]
    %v1129 = vld [vmem:[#allocation4 + $0x250] sm:$0xff]
    %v1130 = vld [vmem:[#allocation4 + $0x258] sm:$0xff]
    %v1131 = vld [vmem:[#allocation4 + $0x260] sm:$0xff]
    %v1132 = vld [vmem:[#allocation4 + $0x268] sm:$0xff]
    %v1133 = vld [vmem:[#allocation4 + $0x270] sm:$0xff]
    %v1134 = vld [vmem:[#allocation4 + $0x278] sm:$0xff]
    %v1135 = vld [vmem:[#allocation4 + $0x280] sm:$0xff]
    %v1136 = vld [vmem:[#allocation4 + $0x288] sm:$0xff]
    %v1137 = vld [vmem:[#allocation4 + $0x290] sm:$0xff]
    %v1138 = vld [vmem:[#allocation4 + $0x298] sm:$0xff]
    %v1139 = vld [vmem:[#allocation4 + $0x2a0] sm:$0xff]
    %v1140 = vld [vmem:[#allocation4 + $0x2a8] sm:$0xff]
    %v1141 = vld [vmem:[#allocation4 + $0x2b0] sm:$0xff]
    %v1142 = vld [vmem:[#allocation4 + $0x2b8] sm:$0xff]
    %v1143 = vld [vmem:[#allocation4 + $0x2c0] sm:$0xff]
    %v1144 = vld [vmem:[#allocation4 + $0x2c8] sm:$0xff]
    %v1145 = vld [vmem:[#allocation4 + $0x2d0] sm:$0xff]
    %v1146 = vld [vmem:[#allocation4 + $0x2d8] sm:$0xff]
    %v1147 = vld [vmem:[#allocation4 + $0x2e0] sm:$0xff]
    %v1148 = vld [vmem:[#allocation4 + $0x2e8] sm:$0xff]
    %v1149 = vld [vmem:[#allocation4 + $0x2f0] sm:$0xff]
    %v1150 = vld [vmem:[#allocation4 + $0x2f8] sm:$0xff]
    %v1151 = vld [vmem:[#allocation4 + $0x300] sm:$0xff]
    %v1152 = vld [vmem:[#allocation4 + $0x308] sm:$0xff]
    %v1153 = vld [vmem:[#allocation4 + $0x310] sm:$0xff]
    %v1154 = vld [vmem:[#allocation4 + $0x318] sm:$0xff]
    %v1155 = vld [vmem:[#allocation4 + $0x320] sm:$0xff]
    %v1156 = vld [vmem:[#allocation4 + $0x328] sm:$0xff]
    %v1157 = vld [vmem:[#allocation4 + $0x330] sm:$0xff]
    %v1158 = vld [vmem:[#allocation4 + $0x338] sm:$0xff]
    %v1159 = vld [vmem:[#allocation4 + $0x340] sm:$0xff]
    %v1160 = vld [vmem:[#allocation4 + $0x348] sm:$0xff]
    %v1161 = vld [vmem:[#allocation4 + $0x350] sm:$0xff]
    %v1162 = vld [vmem:[#allocation4 + $0x358] sm:$0xff]
    %v1163 = vld [vmem:[#allocation4 + $0x360] sm:$0xff]
    %v1164 = vld [vmem:[#allocation4 + $0x368] sm:$0xff]
    %v1165 = vld [vmem:[#allocation4 + $0x370] sm:$0xff]
    %v1166 = vld [vmem:[#allocation4 + $0x378] sm:$0xff]
    %v1167 = vld [vmem:[#allocation4 + $0x380] sm:$0xff]
    %v1168 = vld [vmem:[#allocation4 + $0x388] sm:$0xff]
    %v1169 = vld [vmem:[#allocation4 + $0x390] sm:$0xff]
    %v1170 = vld [vmem:[#allocation4 + $0x398] sm:$0xff]
    %v1171 = vld [vmem:[#allocation4 + $0x3a0] sm:$0xff]
    %v1172 = vld [vmem:[#allocation4 + $0x3a8] sm:$0xff]
    %v1173 = vld [vmem:[#allocation4 + $0x3b0] sm:$0xff]
    %v1174 = vld [vmem:[#allocation4 + $0x3b8] sm:$0xff]
    %v1175 = vld [vmem:[#allocation4 + $0x3c0] sm:$0xff]
    %v1176 = vld [vmem:[#allocation4 + $0x3c8] sm:$0xff]
    %v1177 = vld [vmem:[#allocation4 + $0x3d0] sm:$0xff]
    %v1178 = vld [vmem:[#allocation4 + $0x3d8] sm:$0xff]
    %v1179 = vld [vmem:[#allocation4 + $0x3e0] sm:$0xff]
    %v1180 = vld [vmem:[#allocation4 + $0x3e8] sm:$0xff]
    %v1181 = vld [vmem:[#allocation4 + $0x3f0] sm:$0xff]
    %v1182 = vld [vmem:[#allocation4 + $0x3f8] sm:$0xff]
    %v1183 = vld [vmem:[#allocation4 + $0x400] sm:$0xff]
    %v1184 = vld [vmem:[#allocation4 + $0x408] sm:$0xff]
    %v1185 = vld [vmem:[#allocation4 + $0x410] sm:$0xff]
    %v1186 = vld [vmem:[#allocation4 + $0x418] sm:$0xff]
    %v1187 = vld [vmem:[#allocation4 + $0x420] sm:$0xff]
    %v1188 = vld [vmem:[#allocation4 + $0x428] sm:$0xff]
    %v1189 = vld [vmem:[#allocation4 + $0x430] sm:$0xff]
    %v1190 = vld [vmem:[#allocation4 + $0x438] sm:$0xff]
    %v1191 = vld [vmem:[#allocation4 + $0x440] sm:$0xff]
    %v1192 = vld [vmem:[#allocation4 + $0x448] sm:$0xff]
    %v1193 = vld [vmem:[#allocation4 + $0x450] sm:$0xff]
    %v1194 = vld [vmem:[#allocation4 + $0x458] sm:$0xff]
    %v1195 = vld [vmem:[#allocation4 + $0x460] sm:$0xff]
    %v1196 = vld [vmem:[#allocation4 + $0x468] sm:$0xff]
    %v1197 = vld [vmem:[#allocation4 + $0x470] sm:$0xff]
    %v1198 = vld [vmem:[#allocation4 + $0x478] sm:$0xff]
    %v1199 = vld [vmem:[#allocation4 + $0x480] sm:$0xff]
    %v1200 = vld [vmem:[#allocation4 + $0x488] sm:$0xff]
    %v1201 = vld [vmem:[#allocation4 + $0x490] sm:$0xff]
    %v1202 = vld [vmem:[#allocation4 + $0x498] sm:$0xff]
    %v1203 = vld [vmem:[#allocation4 + $0x4a0] sm:$0xff]
    %v1204 = vld [vmem:[#allocation4 + $0x4a8] sm:$0xff]
    %v1205 = vld [vmem:[#allocation4 + $0x4b0] sm:$0xff]
    %v1206 = vld [vmem:[#allocation4 + $0x4b8] sm:$0xff]
    %v1207 = vld [vmem:[#allocation4 + $0x4c0] sm:$0xff]
    %v1208 = vld [vmem:[#allocation4 + $0x4c8] sm:$0xff]
    %v1209 = vld [vmem:[#allocation4 + $0x4d0] sm:$0xff]
    %v1210 = vld [vmem:[#allocation4 + $0x4d8] sm:$0xff]
    %v1211 = vld [vmem:[#allocation4 + $0x4e0] sm:$0xff]
    %v1212 = vld [vmem:[#allocation4 + $0x4e8] sm:$0xff]
    %v1213 = vld [vmem:[#allocation4 + $0x4f0] sm:$0xff]
    %v1214 = vld [vmem:[#allocation4 + $0x4f8] sm:$0xff]
    %v1215 = vld [vmem:[#allocation4 + $0x500] sm:$0xff]
    %v1216 = vld [vmem:[#allocation4 + $0x508] sm:$0xff]
    %v1217 = vld [vmem:[#allocation4 + $0x510] sm:$0xff]
    %v1218 = vld [vmem:[#allocation4 + $0x518] sm:$0xff]
    %v1219 = vld [vmem:[#allocation4 + $0x520] sm:$0xff]
    %v1220 = vld [vmem:[#allocation4 + $0x528] sm:$0xff]
    %v1221 = vld [vmem:[#allocation4 + $0x530] sm:$0xff]
    %v1222 = vld [vmem:[#allocation4 + $0x538] sm:$0xff]
    %v1223 = vld [vmem:[#allocation4 + $0x540] sm:$0xff]
    %v1224 = vld [vmem:[#allocation4 + $0x548] sm:$0xff]
    %v1225 = vld [vmem:[#allocation4 + $0x550] sm:$0xff]
    %v1226 = vld [vmem:[#allocation4 + $0x558] sm:$0xff]
    %v1227 = vld [vmem:[#allocation4 + $0x560] sm:$0xff]
    %v1228 = vld [vmem:[#allocation4 + $0x568] sm:$0xff]
    %v1229 = vld [vmem:[#allocation4 + $0x570] sm:$0xff]
    %v1230 = vld [vmem:[#allocation4 + $0x578] sm:$0xff]
    %v1231 = vld [vmem:[#allocation4 + $0x580] sm:$0xff]
    %v1232 = vld [vmem:[#allocation4 + $0x588] sm:$0xff]
    %v1233 = vld [vmem:[#allocation4 + $0x590] sm:$0xff]
    %v1234 = vld [vmem:[#allocation4 + $0x598] sm:$0xff]
    %v1235 = vld [vmem:[#allocation4 + $0x5a0] sm:$0xff]
    %v1236 = vld [vmem:[#allocation4 + $0x5a8] sm:$0xff]
    %v1237 = vld [vmem:[#allocation4 + $0x5b0] sm:$0xff]
    %v1238 = vld [vmem:[#allocation4 + $0x5b8] sm:$0xff]
    %v1239 = vld [vmem:[#allocation4 + $0x5c0] sm:$0xff]
    %v1240 = vld [vmem:[#allocation4 + $0x5c8] sm:$0xff]
    %v1241 = vld [vmem:[#allocation4 + $0x5d0] sm:$0xff]
    %v1242 = vld [vmem:[#allocation4 + $0x5d8] sm:$0xff]
    %v1243 = vld [vmem:[#allocation4 + $0x5e0] sm:$0xff]
    %v1244 = vld [vmem:[#allocation4 + $0x5e8] sm:$0xff]
    %v1245 = vld [vmem:[#allocation4 + $0x5f0] sm:$0xff]
    %v1246 = vld [vmem:[#allocation4 + $0x5f8] sm:$0xff]
    %v1247 = vld [vmem:[#allocation4 + $0x600] sm:$0xff]
    %v1248 = vld [vmem:[#allocation4 + $0x608] sm:$0xff]
    %v1249 = vld [vmem:[#allocation4 + $0x610] sm:$0xff]
    %v1250 = vld [vmem:[#allocation4 + $0x618] sm:$0xff]
    %v1251 = vld [vmem:[#allocation4 + $0x620] sm:$0xff]
    %v1252 = vld [vmem:[#allocation4 + $0x628] sm:$0xff]
    %v1253 = vld [vmem:[#allocation4 + $0x630] sm:$0xff]
    %v1254 = vld [vmem:[#allocation4 + $0x638] sm:$0xff]
    %v1255 = vld [vmem:[#allocation4 + $0x640] sm:$0xff]
    %v1256 = vld [vmem:[#allocation4 + $0x648] sm:$0xff]
    %v1257 = vld [vmem:[#allocation4 + $0x650] sm:$0xff]
    %v1258 = vld [vmem:[#allocation4 + $0x658] sm:$0xff]
    %v1259 = vld [vmem:[#allocation4 + $0x660] sm:$0xff]
    %v1260 = vld [vmem:[#allocation4 + $0x668] sm:$0xff]
    %v1261 = vld [vmem:[#allocation4 + $0x670] sm:$0xff]
    %v1262 = vld [vmem:[#allocation4 + $0x678] sm:$0xff]
    %v1263 = vld [vmem:[#allocation4 + $0x680] sm:$0xff]
    %v1264 = vld [vmem:[#allocation4 + $0x688] sm:$0xff]
    %v1265 = vld [vmem:[#allocation4 + $0x690] sm:$0xff]
    %v1266 = vld [vmem:[#allocation4 + $0x698] sm:$0xff]
    %v1267 = vld [vmem:[#allocation4 + $0x6a0] sm:$0xff]
    %v1268 = vld [vmem:[#allocation4 + $0x6a8] sm:$0xff]
    %v1269 = vld [vmem:[#allocation4 + $0x6b0] sm:$0xff]
    %v1270 = vld [vmem:[#allocation4 + $0x6b8] sm:$0xff]
    %v1271 = vld [vmem:[#allocation4 + $0x6c0] sm:$0xff]
    %v1272 = vld [vmem:[#allocation4 + $0x6c8] sm:$0xff]
    %v1273 = vld [vmem:[#allocation4 + $0x6d0] sm:$0xff]
    %v1274 = vld [vmem:[#allocation4 + $0x6d8] sm:$0xff]
    %v1275 = vld [vmem:[#allocation4 + $0x6e0] sm:$0xff]
    %v1276 = vld [vmem:[#allocation4 + $0x6e8] sm:$0xff]
    %v1277 = vld [vmem:[#allocation4 + $0x6f0] sm:$0xff]
    %v1278 = vld [vmem:[#allocation4 + $0x6f8] sm:$0xff]
    %v1279 = vld [vmem:[#allocation4 + $0x700] sm:$0xff]
    %v1280 = vld [vmem:[#allocation4 + $0x708] sm:$0xff]
    %v1281 = vld [vmem:[#allocation4 + $0x710] sm:$0xff]
    %v1282 = vld [vmem:[#allocation4 + $0x718] sm:$0xff]
    %v1283 = vld [vmem:[#allocation4 + $0x720] sm:$0xff]
    %v1284 = vld [vmem:[#allocation4 + $0x728] sm:$0xff]
    %v1285 = vld [vmem:[#allocation4 + $0x730] sm:$0xff]
    %v1286 = vld [vmem:[#allocation4 + $0x738] sm:$0xff]
    %v1287 = vld [vmem:[#allocation4 + $0x740] sm:$0xff]
    %v1288 = vld [vmem:[#allocation4 + $0x748] sm:$0xff]
    %v1289 = vld [vmem:[#allocation4 + $0x750] sm:$0xff]
    %v1290 = vld [vmem:[#allocation4 + $0x758] sm:$0xff]
    %v1291 = vld [vmem:[#allocation4 + $0x760] sm:$0xff]
    %v1292 = vld [vmem:[#allocation4 + $0x768] sm:$0xff]
    %v1293 = vld [vmem:[#allocation4 + $0x770] sm:$0xff]
    %v1294 = vld [vmem:[#allocation4 + $0x778] sm:$0xff]
    %v1295 = vld [vmem:[#allocation4 + $0x780] sm:$0xff]
    %v1296 = vld [vmem:[#allocation4 + $0x788] sm:$0xff]
    %v1297 = vld [vmem:[#allocation4 + $0x790] sm:$0xff]
    %v1298 = vld [vmem:[#allocation4 + $0x798] sm:$0xff]
    %v1299 = vld [vmem:[#allocation4 + $0x7a0] sm:$0xff]
    %v1300 = vld [vmem:[#allocation4 + $0x7a8] sm:$0xff]
    %v1301 = vld [vmem:[#allocation4 + $0x7b0] sm:$0xff]
    %v1302 = vld [vmem:[#allocation4 + $0x7b8] sm:$0xff]
    %v1303 = vld [vmem:[#allocation4 + $0x7c0] sm:$0xff]
    %v1304 = vld [vmem:[#allocation4 + $0x7c8] sm:$0xff]
    %v1305 = vld [vmem:[#allocation4 + $0x7d0] sm:$0xff]
    %v1306 = vld [vmem:[#allocation4 + $0x7d8] sm:$0xff]
    %v1307 = vld [vmem:[#allocation4 + $0x7e0] sm:$0xff]
    %v1308 = vld [vmem:[#allocation4 + $0x7e8] sm:$0xff]
    %v1309 = vld [vmem:[#allocation4 + $0x7f0] sm:$0xff]
    %v1310 = vld [vmem:[#allocation4 + $0x7f8] sm:$0xff]
    %v1311 = vld [vmem:[%s5] sm:$0xf]
    %v1313 = vlaneseq
    %v1314 = vshrl.u32 %v1313, 7
    %v1315 = vsub.s32 0, %v1314
    %v1316 = vrot.slane %v1311, %v1315
    %v1317 = vlaneseq
    %v1318 = vshrl.u32 %v1317, 7
    %v1319 = vsub.s32 1, %v1318
    %v1320 = vrot.slane %v1311, %v1319
    %v1321 = vlaneseq
    %v1322 = vshrl.u32 %v1321, 7
    %v1323 = vsub.s32 2, %v1322
    %v1324 = vrot.slane %v1311, %v1323
    %v1325 = vlaneseq
    %v1326 = vshrl.u32 %v1325, 7
    %v1327 = vsub.s32 3, %v1326
    %v1328 = vrot.slane %v1311, %v1327
    %v1589 = vunpack.c.l.b16 %v1055
    %v1590 = vunpack.c.h.b16 %v1055
    %v1591 = vunpack.c.l.b16 %v1056
    %v1592 = vunpack.c.h.b16 %v1056
    %v1593 = vunpack.c.l.b16 %v1057
    %v1594 = vunpack.c.h.b16 %v1057
    %v1595 = vunpack.c.l.b16 %v1058
    %v1596 = vunpack.c.h.b16 %v1058
    %v1597 = vunpack.c.l.b16 %v1059
    %v1598 = vunpack.c.h.b16 %v1059
    %v1599 = vunpack.c.l.b16 %v1060
    %v1600 = vunpack.c.h.b16 %v1060
    %v1601 = vunpack.c.l.b16 %v1061
    %v1602 = vunpack.c.h.b16 %v1061
    %v1603 = vunpack.c.l.b16 %v1062
    %v1604 = vunpack.c.h.b16 %v1062
    %v1605 = vunpack.c.l.b16 %v1063
    %v1606 = vunpack.c.h.b16 %v1063
    %v1607 = vunpack.c.l.b16 %v1064
    %v1608 = vunpack.c.h.b16 %v1064
    %v1609 = vunpack.c.l.b16 %v1065
    %v1610 = vunpack.c.h.b16 %v1065
    %v1611 = vunpack.c.l.b16 %v1066
    %v1612 = vunpack.c.h.b16 %v1066
    %v1613 = vunpack.c.l.b16 %v1067
    %v1614 = vunpack.c.h.b16 %v1067
    %v1615 = vunpack.c.l.b16 %v1068
    %v1616 = vunpack.c.h.b16 %v1068
    %v1617 = vunpack.c.l.b16 %v1069
    %v1618 = vunpack.c.h.b16 %v1069
    %v1619 = vunpack.c.l.b16 %v1070
    %v1620 = vunpack.c.h.b16 %v1070
    %v1621 = vunpack.c.l.b16 %v1071
    %v1622 = vunpack.c.h.b16 %v1071
    %v1623 = vunpack.c.l.b16 %v1072
    %v1624 = vunpack.c.h.b16 %v1072
    %v1625 = vunpack.c.l.b16 %v1073
    %v1626 = vunpack.c.h.b16 %v1073
    %v1627 = vunpack.c.l.b16 %v1074
    %v1628 = vunpack.c.h.b16 %v1074
    %v1629 = vunpack.c.l.b16 %v1075
    %v1630 = vunpack.c.h.b16 %v1075
    %v1631 = vunpack.c.l.b16 %v1076
    %v1632 = vunpack.c.h.b16 %v1076
    %v1633 = vunpack.c.l.b16 %v1077
    %v1634 = vunpack.c.h.b16 %v1077
    %v1635 = vunpack.c.l.b16 %v1078
    %v1636 = vunpack.c.h.b16 %v1078
    %v1637 = vunpack.c.l.b16 %v1079
    %v1638 = vunpack.c.h.b16 %v1079
    %v1639 = vunpack.c.l.b16 %v1080
    %v1640 = vunpack.c.h.b16 %v1080
    %v1641 = vunpack.c.l.b16 %v1081
    %v1642 = vunpack.c.h.b16 %v1081
    %v1643 = vunpack.c.l.b16 %v1082
    %v1644 = vunpack.c.h.b16 %v1082
    %v1645 = vunpack.c.l.b16 %v1083
    %v1646 = vunpack.c.h.b16 %v1083
    %v1647 = vunpack.c.l.b16 %v1084
    %v1648 = vunpack.c.h.b16 %v1084
    %v1649 = vunpack.c.l.b16 %v1085
    %v1650 = vunpack.c.h.b16 %v1085
    %v1651 = vunpack.c.l.b16 %v1086
    %v1652 = vunpack.c.h.b16 %v1086
    %v1653 = vunpack.c.l.b16 %v1087
    %v1654 = vunpack.c.h.b16 %v1087
    %v1655 = vunpack.c.l.b16 %v1088
    %v1656 = vunpack.c.h.b16 %v1088
    %v1657 = vunpack.c.l.b16 %v1089
    %v1658 = vunpack.c.h.b16 %v1089
    %v1659 = vunpack.c.l.b16 %v1090
    %v1660 = vunpack.c.h.b16 %v1090
    %v1661 = vunpack.c.l.b16 %v1091
    %v1662 = vunpack.c.h.b16 %v1091
    %v1663 = vunpack.c.l.b16 %v1092
    %v1664 = vunpack.c.h.b16 %v1092
    %v1665 = vunpack.c.l.b16 %v1093
    %v1666 = vunpack.c.h.b16 %v1093
    %v1667 = vunpack.c.l.b16 %v1094
    %v1668 = vunpack.c.h.b16 %v1094
    %v1669 = vunpack.c.l.b16 %v1095
    %v1670 = vunpack.c.h.b16 %v1095
    %v1671 = vunpack.c.l.b16 %v1096
    %v1672 = vunpack.c.h.b16 %v1096
    %v1673 = vunpack.c.l.b16 %v1097
    %v1674 = vunpack.c.h.b16 %v1097
    %v1675 = vunpack.c.l.b16 %v1098
    %v1676 = vunpack.c.h.b16 %v1098
    %v1677 = vunpack.c.l.b16 %v1099
    %v1678 = vunpack.c.h.b16 %v1099
    %v1679 = vunpack.c.l.b16 %v1100
    %v1680 = vunpack.c.h.b16 %v1100
    %v1681 = vunpack.c.l.b16 %v1101
    %v1682 = vunpack.c.h.b16 %v1101
    %v1683 = vunpack.c.l.b16 %v1102
    %v1684 = vunpack.c.h.b16 %v1102
    %v1685 = vunpack.c.l.b16 %v1103
    %v1686 = vunpack.c.h.b16 %v1103
    %v1687 = vunpack.c.l.b16 %v1104
    %v1688 = vunpack.c.h.b16 %v1104
    %v1689 = vunpack.c.l.b16 %v1105
    %v1690 = vunpack.c.h.b16 %v1105
    %v1691 = vunpack.c.l.b16 %v1106
    %v1692 = vunpack.c.h.b16 %v1106
    %v1693 = vunpack.c.l.b16 %v1107
    %v1694 = vunpack.c.h.b16 %v1107
    %v1695 = vunpack.c.l.b16 %v1108
    %v1696 = vunpack.c.h.b16 %v1108
    %v1697 = vunpack.c.l.b16 %v1109
    %v1698 = vunpack.c.h.b16 %v1109
    %v1699 = vunpack.c.l.b16 %v1110
    %v1700 = vunpack.c.h.b16 %v1110
    %v1701 = vunpack.c.l.b16 %v1111
    %v1702 = vunpack.c.h.b16 %v1111
    %v1703 = vunpack.c.l.b16 %v1112
    %v1704 = vunpack.c.h.b16 %v1112
    %v1705 = vunpack.c.l.b16 %v1113
    %v1706 = vunpack.c.h.b16 %v1113
    %v1707 = vunpack.c.l.b16 %v1114
    %v1708 = vunpack.c.h.b16 %v1114
    %v1709 = vunpack.c.l.b16 %v1115
    %v1710 = vunpack.c.h.b16 %v1115
    %v1711 = vunpack.c.l.b16 %v1116
    %v1712 = vunpack.c.h.b16 %v1116
    %v1713 = vunpack.c.l.b16 %v1117
    %v1714 = vunpack.c.h.b16 %v1117
    %v1715 = vunpack.c.l.b16 %v1118
    %v1716 = vunpack.c.h.b16 %v1118
    %v1717 = vunpack.c.l.b16 %v1119
    %v1718 = vunpack.c.h.b16 %v1119
    %v1719 = vunpack.c.l.b16 %v1120
    %v1720 = vunpack.c.h.b16 %v1120
    %v1721 = vunpack.c.l.b16 %v1121
    %v1722 = vunpack.c.h.b16 %v1121
    %v1723 = vunpack.c.l.b16 %v1122
    %v1724 = vunpack.c.h.b16 %v1122
    %v1725 = vunpack.c.l.b16 %v1123
    %v1726 = vunpack.c.h.b16 %v1123
    %v1727 = vunpack.c.l.b16 %v1124
    %v1728 = vunpack.c.h.b16 %v1124
    %v1729 = vunpack.c.l.b16 %v1125
    %v1730 = vunpack.c.h.b16 %v1125
    %v1731 = vunpack.c.l.b16 %v1126
    %v1732 = vunpack.c.h.b16 %v1126
    %v1733 = vunpack.c.l.b16 %v1127
    %v1734 = vunpack.c.h.b16 %v1127
    %v1735 = vunpack.c.l.b16 %v1128
    %v1736 = vunpack.c.h.b16 %v1128
    %v1737 = vunpack.c.l.b16 %v1129
    %v1738 = vunpack.c.h.b16 %v1129
    %v1739 = vunpack.c.l.b16 %v1130
    %v1740 = vunpack.c.h.b16 %v1130
    %v1741 = vunpack.c.l.b16 %v1131
    %v1742 = vunpack.c.h.b16 %v1131
    %v1743 = vunpack.c.l.b16 %v1132
    %v1744 = vunpack.c.h.b16 %v1132
    %v1745 = vunpack.c.l.b16 %v1133
    %v1746 = vunpack.c.h.b16 %v1133
    %v1747 = vunpack.c.l.b16 %v1134
    %v1748 = vunpack.c.h.b16 %v1134
    %v1749 = vunpack.c.l.b16 %v1135
    %v1750 = vunpack.c.h.b16 %v1135
    %v1751 = vunpack.c.l.b16 %v1136
    %v1752 = vunpack.c.h.b16 %v1136
    %v1753 = vunpack.c.l.b16 %v1137
    %v1754 = vunpack.c.h.b16 %v1137
    %v1755 = vunpack.c.l.b16 %v1138
    %v1756 = vunpack.c.h.b16 %v1138
    %v1757 = vunpack.c.l.b16 %v1139
    %v1758 = vunpack.c.h.b16 %v1139
    %v1759 = vunpack.c.l.b16 %v1140
    %v1760 = vunpack.c.h.b16 %v1140
    %v1761 = vunpack.c.l.b16 %v1141
    %v1762 = vunpack.c.h.b16 %v1141
    %v1763 = vunpack.c.l.b16 %v1142
    %v1764 = vunpack.c.h.b16 %v1142
    %v1765 = vunpack.c.l.b16 %v1143
    %v1766 = vunpack.c.h.b16 %v1143
    %v1767 = vunpack.c.l.b16 %v1144
    %v1768 = vunpack.c.h.b16 %v1144
    %v1769 = vunpack.c.l.b16 %v1145
    %v1770 = vunpack.c.h.b16 %v1145
    %v1771 = vunpack.c.l.b16 %v1146
    %v1772 = vunpack.c.h.b16 %v1146
    %v1773 = vunpack.c.l.b16 %v1147
    %v1774 = vunpack.c.h.b16 %v1147
    %v1775 = vunpack.c.l.b16 %v1148
    %v1776 = vunpack.c.h.b16 %v1148
    %v1777 = vunpack.c.l.b16 %v1149
    %v1778 = vunpack.c.h.b16 %v1149
    %v1779 = vunpack.c.l.b16 %v1150
    %v1780 = vunpack.c.h.b16 %v1150
    %v1781 = vunpack.c.l.b16 %v1151
    %v1782 = vunpack.c.h.b16 %v1151
    %v1783 = vunpack.c.l.b16 %v1152
    %v1784 = vunpack.c.h.b16 %v1152
    %v1785 = vunpack.c.l.b16 %v1153
    %v1786 = vunpack.c.h.b16 %v1153
    %v1787 = vunpack.c.l.b16 %v1154
    %v1788 = vunpack.c.h.b16 %v1154
    %v1789 = vunpack.c.l.b16 %v1155
    %v1790 = vunpack.c.h.b16 %v1155
    %v1791 = vunpack.c.l.b16 %v1156
    %v1792 = vunpack.c.h.b16 %v1156
    %v1793 = vunpack.c.l.b16 %v1157
    %v1794 = vunpack.c.h.b16 %v1157
    %v1795 = vunpack.c.l.b16 %v1158
    %v1796 = vunpack.c.h.b16 %v1158
    %v1797 = vunpack.c.l.b16 %v1159
    %v1798 = vunpack.c.h.b16 %v1159
    %v1799 = vunpack.c.l.b16 %v1160
    %v1800 = vunpack.c.h.b16 %v1160
    %v1801 = vunpack.c.l.b16 %v1161
    %v1802 = vunpack.c.h.b16 %v1161
    %v1803 = vunpack.c.l.b16 %v1162
    %v1804 = vunpack.c.h.b16 %v1162
    %v1805 = vunpack.c.l.b16 %v1163
    %v1806 = vunpack.c.h.b16 %v1163
    %v1807 = vunpack.c.l.b16 %v1164
    %v1808 = vunpack.c.h.b16 %v1164
    %v1809 = vunpack.c.l.b16 %v1165
    %v1810 = vunpack.c.h.b16 %v1165
    %v1811 = vunpack.c.l.b16 %v1166
    %v1812 = vunpack.c.h.b16 %v1166
    %v1813 = vunpack.c.l.b16 %v1167
    %v1814 = vunpack.c.h.b16 %v1167
    %v1815 = vunpack.c.l.b16 %v1168
    %v1816 = vunpack.c.h.b16 %v1168
    %v1817 = vunpack.c.l.b16 %v1169
    %v1818 = vunpack.c.h.b16 %v1169
    %v1819 = vunpack.c.l.b16 %v1170
    %v1820 = vunpack.c.h.b16 %v1170
    %v1821 = vunpack.c.l.b16 %v1171
    %v1822 = vunpack.c.h.b16 %v1171
    %v1823 = vunpack.c.l.b16 %v1172
    %v1824 = vunpack.c.h.b16 %v1172
    %v1825 = vunpack.c.l.b16 %v1173
    %v1826 = vunpack.c.h.b16 %v1173
    %v1827 = vunpack.c.l.b16 %v1174
    %v1828 = vunpack.c.h.b16 %v1174
    %v1829 = vunpack.c.l.b16 %v1175
    %v1830 = vunpack.c.h.b16 %v1175
    %v1831 = vunpack.c.l.b16 %v1176
    %v1832 = vunpack.c.h.b16 %v1176
    %v1833 = vunpack.c.l.b16 %v1177
    %v1834 = vunpack.c.h.b16 %v1177
    %v1835 = vunpack.c.l.b16 %v1178
    %v1836 = vunpack.c.h.b16 %v1178
    %v1837 = vunpack.c.l.b16 %v1179
    %v1838 = vunpack.c.h.b16 %v1179
    %v1839 = vunpack.c.l.b16 %v1180
    %v1840 = vunpack.c.h.b16 %v1180
    %v1841 = vunpack.c.l.b16 %v1181
    %v1842 = vunpack.c.h.b16 %v1181
    %v1843 = vunpack.c.l.b16 %v1182
    %v1844 = vunpack.c.h.b16 %v1182
    %v1845 = vunpack.c.l.b16 %v1183
    %v1846 = vunpack.c.h.b16 %v1183
    %v1847 = vunpack.c.l.b16 %v1184
    %v1848 = vunpack.c.h.b16 %v1184
    %v1849 = vunpack.c.l.b16 %v1185
    %v1850 = vunpack.c.h.b16 %v1185
    %v1851 = vunpack.c.l.b16 %v1186
    %v1852 = vunpack.c.h.b16 %v1186
    %v1853 = vunpack.c.l.b16 %v1187
    %v1854 = vunpack.c.h.b16 %v1187
    %v1855 = vunpack.c.l.b16 %v1188
    %v1856 = vunpack.c.h.b16 %v1188
    %v1857 = vunpack.c.l.b16 %v1189
    %v1858 = vunpack.c.h.b16 %v1189
    %v1859 = vunpack.c.l.b16 %v1190
    %v1860 = vunpack.c.h.b16 %v1190
    %v1861 = vunpack.c.l.b16 %v1191
    %v1862 = vunpack.c.h.b16 %v1191
    %v1863 = vunpack.c.l.b16 %v1192
    %v1864 = vunpack.c.h.b16 %v1192
    %v1865 = vunpack.c.l.b16 %v1193
    %v1866 = vunpack.c.h.b16 %v1193
    %v1867 = vunpack.c.l.b16 %v1194
    %v1868 = vunpack.c.h.b16 %v1194
    %v1869 = vunpack.c.l.b16 %v1195
    %v1870 = vunpack.c.h.b16 %v1195
    %v1871 = vunpack.c.l.b16 %v1196
    %v1872 = vunpack.c.h.b16 %v1196
    %v1873 = vunpack.c.l.b16 %v1197
    %v1874 = vunpack.c.h.b16 %v1197
    %v1875 = vunpack.c.l.b16 %v1198
    %v1876 = vunpack.c.h.b16 %v1198
    %v1877 = vunpack.c.l.b16 %v1199
    %v1878 = vunpack.c.h.b16 %v1199
    %v1879 = vunpack.c.l.b16 %v1200
    %v1880 = vunpack.c.h.b16 %v1200
    %v1881 = vunpack.c.l.b16 %v1201
    %v1882 = vunpack.c.h.b16 %v1201
    %v1883 = vunpack.c.l.b16 %v1202
    %v1884 = vunpack.c.h.b16 %v1202
    %v1885 = vunpack.c.l.b16 %v1203
    %v1886 = vunpack.c.h.b16 %v1203
    %v1887 = vunpack.c.l.b16 %v1204
    %v1888 = vunpack.c.h.b16 %v1204
    %v1889 = vunpack.c.l.b16 %v1205
    %v1890 = vunpack.c.h.b16 %v1205
    %v1891 = vunpack.c.l.b16 %v1206
    %v1892 = vunpack.c.h.b16 %v1206
    %v1893 = vunpack.c.l.b16 %v1207
    %v1894 = vunpack.c.h.b16 %v1207
    %v1895 = vunpack.c.l.b16 %v1208
    %v1896 = vunpack.c.h.b16 %v1208
    %v1897 = vunpack.c.l.b16 %v1209
    %v1898 = vunpack.c.h.b16 %v1209
    %v1899 = vunpack.c.l.b16 %v1210
    %v1900 = vunpack.c.h.b16 %v1210
    %v1901 = vunpack.c.l.b16 %v1211
    %v1902 = vunpack.c.h.b16 %v1211
    %v1903 = vunpack.c.l.b16 %v1212
    %v1904 = vunpack.c.h.b16 %v1212
    %v1905 = vunpack.c.l.b16 %v1213
    %v1906 = vunpack.c.h.b16 %v1213
    %v1907 = vunpack.c.l.b16 %v1214
    %v1908 = vunpack.c.h.b16 %v1214
    %v1909 = vunpack.c.l.b16 %v1215
    %v1910 = vunpack.c.h.b16 %v1215
    %v1911 = vunpack.c.l.b16 %v1216
    %v1912 = vunpack.c.h.b16 %v1216
    %v1913 = vunpack.c.l.b16 %v1217
    %v1914 = vunpack.c.h.b16 %v1217
    %v1915 = vunpack.c.l.b16 %v1218
    %v1916 = vunpack.c.h.b16 %v1218
    %v1917 = vunpack.c.l.b16 %v1219
    %v1918 = vunpack.c.h.b16 %v1219
    %v1919 = vunpack.c.l.b16 %v1220
    %v1920 = vunpack.c.h.b16 %v1220
    %v1921 = vunpack.c.l.b16 %v1221
    %v1922 = vunpack.c.h.b16 %v1221
    %v1923 = vunpack.c.l.b16 %v1222
    %v1924 = vunpack.c.h.b16 %v1222
    %v1925 = vunpack.c.l.b16 %v1223
    %v1926 = vunpack.c.h.b16 %v1223
    %v1927 = vunpack.c.l.b16 %v1224
    %v1928 = vunpack.c.h.b16 %v1224
    %v1929 = vunpack.c.l.b16 %v1225
    %v1930 = vunpack.c.h.b16 %v1225
    %v1931 = vunpack.c.l.b16 %v1226
    %v1932 = vunpack.c.h.b16 %v1226
    %v1933 = vunpack.c.l.b16 %v1227
    %v1934 = vunpack.c.h.b16 %v1227
    %v1935 = vunpack.c.l.b16 %v1228
    %v1936 = vunpack.c.h.b16 %v1228
    %v1937 = vunpack.c.l.b16 %v1229
    %v1938 = vunpack.c.h.b16 %v1229
    %v1939 = vunpack.c.l.b16 %v1230
    %v1940 = vunpack.c.h.b16 %v1230
    %v1941 = vunpack.c.l.b16 %v1231
    %v1942 = vunpack.c.h.b16 %v1231
    %v1943 = vunpack.c.l.b16 %v1232
    %v1944 = vunpack.c.h.b16 %v1232
    %v1945 = vunpack.c.l.b16 %v1233
    %v1946 = vunpack.c.h.b16 %v1233
    %v1947 = vunpack.c.l.b16 %v1234
    %v1948 = vunpack.c.h.b16 %v1234
    %v1949 = vunpack.c.l.b16 %v1235
    %v1950 = vunpack.c.h.b16 %v1235
    %v1951 = vunpack.c.l.b16 %v1236
    %v1952 = vunpack.c.h.b16 %v1236
    %v1953 = vunpack.c.l.b16 %v1237
    %v1954 = vunpack.c.h.b16 %v1237
    %v1955 = vunpack.c.l.b16 %v1238
    %v1956 = vunpack.c.h.b16 %v1238
    %v1957 = vunpack.c.l.b16 %v1239
    %v1958 = vunpack.c.h.b16 %v1239
    %v1959 = vunpack.c.l.b16 %v1240
    %v1960 = vunpack.c.h.b16 %v1240
    %v1961 = vunpack.c.l.b16 %v1241
    %v1962 = vunpack.c.h.b16 %v1241
    %v1963 = vunpack.c.l.b16 %v1242
    %v1964 = vunpack.c.h.b16 %v1242
    %v1965 = vunpack.c.l.b16 %v1243
    %v1966 = vunpack.c.h.b16 %v1243
    %v1967 = vunpack.c.l.b16 %v1244
    %v1968 = vunpack.c.h.b16 %v1244
    %v1969 = vunpack.c.l.b16 %v1245
    %v1970 = vunpack.c.h.b16 %v1245
    %v1971 = vunpack.c.l.b16 %v1246
    %v1972 = vunpack.c.h.b16 %v1246
    %v1973 = vunpack.c.l.b16 %v1247
    %v1974 = vunpack.c.h.b16 %v1247
    %v1975 = vunpack.c.l.b16 %v1248
    %v1976 = vunpack.c.h.b16 %v1248
    %v1977 = vunpack.c.l.b16 %v1249
    %v1978 = vunpack.c.h.b16 %v1249
    %v1979 = vunpack.c.l.b16 %v1250
    %v1980 = vunpack.c.h.b16 %v1250
    %v1981 = vunpack.c.l.b16 %v1251
    %v1982 = vunpack.c.h.b16 %v1251
    %v1983 = vunpack.c.l.b16 %v1252
    %v1984 = vunpack.c.h.b16 %v1252
    %v1985 = vunpack.c.l.b16 %v1253
    %v1986 = vunpack.c.h.b16 %v1253
    %v1987 = vunpack.c.l.b16 %v1254
    %v1988 = vunpack.c.h.b16 %v1254
    %v1989 = vunpack.c.l.b16 %v1255
    %v1990 = vunpack.c.h.b16 %v1255
    %v1991 = vunpack.c.l.b16 %v1256
    %v1992 = vunpack.c.h.b16 %v1256
    %v1993 = vunpack.c.l.b16 %v1257
    %v1994 = vunpack.c.h.b16 %v1257
    %v1995 = vunpack.c.l.b16 %v1258
    %v1996 = vunpack.c.h.b16 %v1258
    %v1997 = vunpack.c.l.b16 %v1259
    %v1998 = vunpack.c.h.b16 %v1259
    %v1999 = vunpack.c.l.b16 %v1260
    %v2000 = vunpack.c.h.b16 %v1260
    %v2001 = vunpack.c.l.b16 %v1261
    %v2002 = vunpack.c.h.b16 %v1261
    %v2003 = vunpack.c.l.b16 %v1262
    %v2004 = vunpack.c.h.b16 %v1262
    %v2005 = vunpack.c.l.b16 %v1263
    %v2006 = vunpack.c.h.b16 %v1263
    %v2007 = vunpack.c.l.b16 %v1264
    %v2008 = vunpack.c.h.b16 %v1264
    %v2009 = vunpack.c.l.b16 %v1265
    %v2010 = vunpack.c.h.b16 %v1265
    %v2011 = vunpack.c.l.b16 %v1266
    %v2012 = vunpack.c.h.b16 %v1266
    %v2013 = vunpack.c.l.b16 %v1267
    %v2014 = vunpack.c.h.b16 %v1267
    %v2015 = vunpack.c.l.b16 %v1268
    %v2016 = vunpack.c.h.b16 %v1268
    %v2017 = vunpack.c.l.b16 %v1269
    %v2018 = vunpack.c.h.b16 %v1269
    %v2019 = vunpack.c.l.b16 %v1270
    %v2020 = vunpack.c.h.b16 %v1270
    %v2021 = vunpack.c.l.b16 %v1271
    %v2022 = vunpack.c.h.b16 %v1271
    %v2023 = vunpack.c.l.b16 %v1272
    %v2024 = vunpack.c.h.b16 %v1272
    %v2025 = vunpack.c.l.b16 %v1273
    %v2026 = vunpack.c.h.b16 %v1273
    %v2027 = vunpack.c.l.b16 %v1274
    %v2028 = vunpack.c.h.b16 %v1274
    %v2029 = vunpack.c.l.b16 %v1275
    %v2030 = vunpack.c.h.b16 %v1275
    %v2031 = vunpack.c.l.b16 %v1276
    %v2032 = vunpack.c.h.b16 %v1276
    %v2033 = vunpack.c.l.b16 %v1277
    %v2034 = vunpack.c.h.b16 %v1277
    %v2035 = vunpack.c.l.b16 %v1278
    %v2036 = vunpack.c.h.b16 %v1278
    %v2037 = vunpack.c.l.b16 %v1279
    %v2038 = vunpack.c.h.b16 %v1279
    %v2039 = vunpack.c.l.b16 %v1280
    %v2040 = vunpack.c.h.b16 %v1280
    %v2041 = vunpack.c.l.b16 %v1281
    %v2042 = vunpack.c.h.b16 %v1281
    %v2043 = vunpack.c.l.b16 %v1282
    %v2044 = vunpack.c.h.b16 %v1282
    %v2045 = vunpack.c.l.b16 %v1283
    %v2046 = vunpack.c.h.b16 %v1283
    %v2047 = vunpack.c.l.b16 %v1284
    %v2048 = vunpack.c.h.b16 %v1284
    %v2049 = vunpack.c.l.b16 %v1285
    %v2050 = vunpack.c.h.b16 %v1285
    %v2051 = vunpack.c.l.b16 %v1286
    %v2052 = vunpack.c.h.b16 %v1286
    %v2053 = vunpack.c.l.b16 %v1287
    %v2054 = vunpack.c.h.b16 %v1287
    %v2055 = vunpack.c.l.b16 %v1288
    %v2056 = vunpack.c.h.b16 %v1288
    %v2057 = vunpack.c.l.b16 %v1289
    %v2058 = vunpack.c.h.b16 %v1289
    %v2059 = vunpack.c.l.b16 %v1290
    %v2060 = vunpack.c.h.b16 %v1290
    %v2061 = vunpack.c.l.b16 %v1291
    %v2062 = vunpack.c.h.b16 %v1291
    %v2063 = vunpack.c.l.b16 %v1292
    %v2064 = vunpack.c.h.b16 %v1292
    %v2065 = vunpack.c.l.b16 %v1293
    %v2066 = vunpack.c.h.b16 %v1293
    %v2067 = vunpack.c.l.b16 %v1294
    %v2068 = vunpack.c.h.b16 %v1294
    %v2069 = vunpack.c.l.b16 %v1295
    %v2070 = vunpack.c.h.b16 %v1295
    %v2071 = vunpack.c.l.b16 %v1296
    %v2072 = vunpack.c.h.b16 %v1296
    %v2073 = vunpack.c.l.b16 %v1297
    %v2074 = vunpack.c.h.b16 %v1297
    %v2075 = vunpack.c.l.b16 %v1298
    %v2076 = vunpack.c.h.b16 %v1298
    %v2077 = vunpack.c.l.b16 %v1299
    %v2078 = vunpack.c.h.b16 %v1299
    %v2079 = vunpack.c.l.b16 %v1300
    %v2080 = vunpack.c.h.b16 %v1300
    %v2081 = vunpack.c.l.b16 %v1301
    %v2082 = vunpack.c.h.b16 %v1301
    %v2083 = vunpack.c.l.b16 %v1302
    %v2084 = vunpack.c.h.b16 %v1302
    %v2085 = vunpack.c.l.b16 %v1303
    %v2086 = vunpack.c.h.b16 %v1303
    %v2087 = vunpack.c.l.b16 %v1304
    %v2088 = vunpack.c.h.b16 %v1304
    %v2089 = vunpack.c.l.b16 %v1305
    %v2090 = vunpack.c.h.b16 %v1305
    %v2091 = vunpack.c.l.b16 %v1306
    %v2092 = vunpack.c.h.b16 %v1306
    %v2093 = vunpack.c.l.b16 %v1307
    %v2094 = vunpack.c.h.b16 %v1307
    %v2095 = vunpack.c.l.b16 %v1308
    %v2096 = vunpack.c.h.b16 %v1308
    %v2097 = vunpack.c.l.b16 %v1309
    %v2098 = vunpack.c.h.b16 %v1309
    %v2099 = vunpack.c.l.b16 %v1310
    %v2100 = vunpack.c.h.b16 %v1310
    %v2101 = vpack.c.b16 %v1593, %v1589
    %v2102 = vpack.c.b16 %v1594, %v1590
    %v2103 = vpack.c.b16 %v1595, %v1591
    %v2104 = vpack.c.b16 %v1596, %v1592
    %v2105 = vpack.c.b16 %v1601, %v1597
    %v2106 = vpack.c.b16 %v1602, %v1598
    %v2107 = vpack.c.b16 %v1603, %v1599
    %v2108 = vpack.c.b16 %v1604, %v1600
    %v2109 = vpack.c.b16 %v1609, %v1605
    %v2110 = vpack.c.b16 %v1610, %v1606
    %v2111 = vpack.c.b16 %v1611, %v1607
    %v2112 = vpack.c.b16 %v1612, %v1608
    %v2113 = vpack.c.b16 %v1617, %v1613
    %v2114 = vpack.c.b16 %v1618, %v1614
    %v2115 = vpack.c.b16 %v1619, %v1615
    %v2116 = vpack.c.b16 %v1620, %v1616
    %v2117 = vpack.c.b16 %v1625, %v1621
    %v2118 = vpack.c.b16 %v1626, %v1622
    %v2119 = vpack.c.b16 %v1627, %v1623
    %v2120 = vpack.c.b16 %v1628, %v1624
    %v2121 = vpack.c.b16 %v1633, %v1629
    %v2122 = vpack.c.b16 %v1634, %v1630
    %v2123 = vpack.c.b16 %v1635, %v1631
    %v2124 = vpack.c.b16 %v1636, %v1632
    %v2125 = vpack.c.b16 %v1641, %v1637
    %v2126 = vpack.c.b16 %v1642, %v1638
    %v2127 = vpack.c.b16 %v1643, %v1639
    %v2128 = vpack.c.b16 %v1644, %v1640
    %v2129 = vpack.c.b16 %v1649, %v1645
    %v2130 = vpack.c.b16 %v1650, %v1646
    %v2131 = vpack.c.b16 %v1651, %v1647
    %v2132 = vpack.c.b16 %v1652, %v1648
    %v2133 = vpack.c.b16 %v1657, %v1653
    %v2134 = vpack.c.b16 %v1658, %v1654
    %v2135 = vpack.c.b16 %v1659, %v1655
    %v2136 = vpack.c.b16 %v1660, %v1656
    %v2137 = vpack.c.b16 %v1665, %v1661
    %v2138 = vpack.c.b16 %v1666, %v1662
    %v2139 = vpack.c.b16 %v1667, %v1663
    %v2140 = vpack.c.b16 %v1668, %v1664
    %v2141 = vpack.c.b16 %v1673, %v1669
    %v2142 = vpack.c.b16 %v1674, %v1670
    %v2143 = vpack.c.b16 %v1675, %v1671
    %v2144 = vpack.c.b16 %v1676, %v1672
    %v2145 = vpack.c.b16 %v1681, %v1677
    %v2146 = vpack.c.b16 %v1682, %v1678
    %v2147 = vpack.c.b16 %v1683, %v1679
    %v2148 = vpack.c.b16 %v1684, %v1680
    %v2149 = vpack.c.b16 %v1689, %v1685
    %v2150 = vpack.c.b16 %v1690, %v1686
    %v2151 = vpack.c.b16 %v1691, %v1687
    %v2152 = vpack.c.b16 %v1692, %v1688
    %v2153 = vpack.c.b16 %v1697, %v1693
    %v2154 = vpack.c.b16 %v1698, %v1694
    %v2155 = vpack.c.b16 %v1699, %v1695
    %v2156 = vpack.c.b16 %v1700, %v1696
    %v2157 = vpack.c.b16 %v1705, %v1701
    %v2158 = vpack.c.b16 %v1706, %v1702
    %v2159 = vpack.c.b16 %v1707, %v1703
    %v2160 = vpack.c.b16 %v1708, %v1704
    %v2161 = vpack.c.b16 %v1713, %v1709
    %v2162 = vpack.c.b16 %v1714, %v1710
    %v2163 = vpack.c.b16 %v1715, %v1711
    %v2164 = vpack.c.b16 %v1716, %v1712
    %v2165 = vpack.c.b16 %v1721, %v1717
    %v2166 = vpack.c.b16 %v1722, %v1718
    %v2167 = vpack.c.b16 %v1723, %v1719
    %v2168 = vpack.c.b16 %v1724, %v1720
    %v2169 = vpack.c.b16 %v1729, %v1725
    %v2170 = vpack.c.b16 %v1730, %v1726
    %v2171 = vpack.c.b16 %v1731, %v1727
    %v2172 = vpack.c.b16 %v1732, %v1728
    %v2173 = vpack.c.b16 %v1737, %v1733
    %v2174 = vpack.c.b16 %v1738, %v1734
    %v2175 = vpack.c.b16 %v1739, %v1735
    %v2176 = vpack.c.b16 %v1740, %v1736
    %v2177 = vpack.c.b16 %v1745, %v1741
    %v2178 = vpack.c.b16 %v1746, %v1742
    %v2179 = vpack.c.b16 %v1747, %v1743
    %v2180 = vpack.c.b16 %v1748, %v1744
    %v2181 = vpack.c.b16 %v1753, %v1749
    %v2182 = vpack.c.b16 %v1754, %v1750
    %v2183 = vpack.c.b16 %v1755, %v1751
    %v2184 = vpack.c.b16 %v1756, %v1752
    %v2185 = vpack.c.b16 %v1761, %v1757
    %v2186 = vpack.c.b16 %v1762, %v1758
    %v2187 = vpack.c.b16 %v1763, %v1759
    %v2188 = vpack.c.b16 %v1764, %v1760
    %v2189 = vpack.c.b16 %v1769, %v1765
    %v2190 = vpack.c.b16 %v1770, %v1766
    %v2191 = vpack.c.b16 %v1771, %v1767
    %v2192 = vpack.c.b16 %v1772, %v1768
    %v2193 = vpack.c.b16 %v1777, %v1773
    %v2194 = vpack.c.b16 %v1778, %v1774
    %v2195 = vpack.c.b16 %v1779, %v1775
    %v2196 = vpack.c.b16 %v1780, %v1776
    %v2197 = vpack.c.b16 %v1785, %v1781
    %v2198 = vpack.c.b16 %v1786, %v1782
    %v2199 = vpack.c.b16 %v1787, %v1783
    %v2200 = vpack.c.b16 %v1788, %v1784
    %v2201 = vpack.c.b16 %v1793, %v1789
    %v2202 = vpack.c.b16 %v1794, %v1790
    %v2203 = vpack.c.b16 %v1795, %v1791
    %v2204 = vpack.c.b16 %v1796, %v1792
    %v2205 = vpack.c.b16 %v1801, %v1797
    %v2206 = vpack.c.b16 %v1802, %v1798
    %v2207 = vpack.c.b16 %v1803, %v1799
    %v2208 = vpack.c.b16 %v1804, %v1800
    %v2209 = vpack.c.b16 %v1809, %v1805
    %v2210 = vpack.c.b16 %v1810, %v1806
    %v2211 = vpack.c.b16 %v1811, %v1807
    %v2212 = vpack.c.b16 %v1812, %v1808
    %v2213 = vpack.c.b16 %v1817, %v1813
    %v2214 = vpack.c.b16 %v1818, %v1814
    %v2215 = vpack.c.b16 %v1819, %v1815
    %v2216 = vpack.c.b16 %v1820, %v1816
    %v2217 = vpack.c.b16 %v1825, %v1821
    %v2218 = vpack.c.b16 %v1826, %v1822
    %v2219 = vpack.c.b16 %v1827, %v1823
    %v2220 = vpack.c.b16 %v1828, %v1824
    %v2221 = vpack.c.b16 %v1833, %v1829
    %v2222 = vpack.c.b16 %v1834, %v1830
    %v2223 = vpack.c.b16 %v1835, %v1831
    %v2224 = vpack.c.b16 %v1836, %v1832
    %v2225 = vpack.c.b16 %v1841, %v1837
    %v2226 = vpack.c.b16 %v1842, %v1838
    %v2227 = vpack.c.b16 %v1843, %v1839
    %v2228 = vpack.c.b16 %v1844, %v1840
    %v2229 = vpack.c.b16 %v1849, %v1845
    %v2230 = vpack.c.b16 %v1850, %v1846
    %v2231 = vpack.c.b16 %v1851, %v1847
    %v2232 = vpack.c.b16 %v1852, %v1848
    %v2233 = vpack.c.b16 %v1857, %v1853
    %v2234 = vpack.c.b16 %v1858, %v1854
    %v2235 = vpack.c.b16 %v1859, %v1855
    %v2236 = vpack.c.b16 %v1860, %v1856
    %v2237 = vpack.c.b16 %v1865, %v1861
    %v2238 = vpack.c.b16 %v1866, %v1862
    %v2239 = vpack.c.b16 %v1867, %v1863
    %v2240 = vpack.c.b16 %v1868, %v1864
    %v2241 = vpack.c.b16 %v1873, %v1869
    %v2242 = vpack.c.b16 %v1874, %v1870
    %v2243 = vpack.c.b16 %v1875, %v1871
    %v2244 = vpack.c.b16 %v1876, %v1872
    %v2245 = vpack.c.b16 %v1881, %v1877
    %v2246 = vpack.c.b16 %v1882, %v1878
    %v2247 = vpack.c.b16 %v1883, %v1879
    %v2248 = vpack.c.b16 %v1884, %v1880
    %v2249 = vpack.c.b16 %v1889, %v1885
    %v2250 = vpack.c.b16 %v1890, %v1886
    %v2251 = vpack.c.b16 %v1891, %v1887
    %v2252 = vpack.c.b16 %v1892, %v1888
    %v2253 = vpack.c.b16 %v1897, %v1893
    %v2254 = vpack.c.b16 %v1898, %v1894
    %v2255 = vpack.c.b16 %v1899, %v1895
    %v2256 = vpack.c.b16 %v1900, %v1896
    %v2257 = vpack.c.b16 %v1905, %v1901
    %v2258 = vpack.c.b16 %v1906, %v1902
    %v2259 = vpack.c.b16 %v1907, %v1903
    %v2260 = vpack.c.b16 %v1908, %v1904
    %v2261 = vpack.c.b16 %v1913, %v1909
    %v2262 = vpack.c.b16 %v1914, %v1910
    %v2263 = vpack.c.b16 %v1915, %v1911
    %v2264 = vpack.c.b16 %v1916, %v1912
    %v2265 = vpack.c.b16 %v1921, %v1917
    %v2266 = vpack.c.b16 %v1922, %v1918
    %v2267 = vpack.c.b16 %v1923, %v1919
    %v2268 = vpack.c.b16 %v1924, %v1920
    %v2269 = vpack.c.b16 %v1929, %v1925
    %v2270 = vpack.c.b16 %v1930, %v1926
    %v2271 = vpack.c.b16 %v1931, %v1927
    %v2272 = vpack.c.b16 %v1932, %v1928
    %v2273 = vpack.c.b16 %v1937, %v1933
    %v2274 = vpack.c.b16 %v1938, %v1934
    %v2275 = vpack.c.b16 %v1939, %v1935
    %v2276 = vpack.c.b16 %v1940, %v1936
    %v2277 = vpack.c.b16 %v1945, %v1941
    %v2278 = vpack.c.b16 %v1946, %v1942
    %v2279 = vpack.c.b16 %v1947, %v1943
    %v2280 = vpack.c.b16 %v1948, %v1944
    %v2281 = vpack.c.b16 %v1953, %v1949
    %v2282 = vpack.c.b16 %v1954, %v1950
    %v2283 = vpack.c.b16 %v1955, %v1951
    %v2284 = vpack.c.b16 %v1956, %v1952
    %v2285 = vpack.c.b16 %v1961, %v1957
    %v2286 = vpack.c.b16 %v1962, %v1958
    %v2287 = vpack.c.b16 %v1963, %v1959
    %v2288 = vpack.c.b16 %v1964, %v1960
    %v2289 = vpack.c.b16 %v1969, %v1965
    %v2290 = vpack.c.b16 %v1970, %v1966
    %v2291 = vpack.c.b16 %v1971, %v1967
    %v2292 = vpack.c.b16 %v1972, %v1968
    %v2293 = vpack.c.b16 %v1977, %v1973
    %v2294 = vpack.c.b16 %v1978, %v1974
    %v2295 = vpack.c.b16 %v1979, %v1975
    %v2296 = vpack.c.b16 %v1980, %v1976
    %v2297 = vpack.c.b16 %v1985, %v1981
    %v2298 = vpack.c.b16 %v1986, %v1982
    %v2299 = vpack.c.b16 %v1987, %v1983
    %v2300 = vpack.c.b16 %v1988, %v1984
    %v2301 = vpack.c.b16 %v1993, %v1989
    %v2302 = vpack.c.b16 %v1994, %v1990
    %v2303 = vpack.c.b16 %v1995, %v1991
    %v2304 = vpack.c.b16 %v1996, %v1992
    %v2305 = vpack.c.b16 %v2001, %v1997
    %v2306 = vpack.c.b16 %v2002, %v1998
    %v2307 = vpack.c.b16 %v2003, %v1999
    %v2308 = vpack.c.b16 %v2004, %v2000
    %v2309 = vpack.c.b16 %v2009, %v2005
    %v2310 = vpack.c.b16 %v2010, %v2006
    %v2311 = vpack.c.b16 %v2011, %v2007
    %v2312 = vpack.c.b16 %v2012, %v2008
    %v2313 = vpack.c.b16 %v2017, %v2013
    %v2314 = vpack.c.b16 %v2018, %v2014
    %v2315 = vpack.c.b16 %v2019, %v2015
    %v2316 = vpack.c.b16 %v2020, %v2016
    %v2317 = vpack.c.b16 %v2025, %v2021
    %v2318 = vpack.c.b16 %v2026, %v2022
    %v2319 = vpack.c.b16 %v2027, %v2023
    %v2320 = vpack.c.b16 %v2028, %v2024
    %v2321 = vpack.c.b16 %v2033, %v2029
    %v2322 = vpack.c.b16 %v2034, %v2030
    %v2323 = vpack.c.b16 %v2035, %v2031
    %v2324 = vpack.c.b16 %v2036, %v2032
    %v2325 = vpack.c.b16 %v2041, %v2037
    %v2326 = vpack.c.b16 %v2042, %v2038
    %v2327 = vpack.c.b16 %v2043, %v2039
    %v2328 = vpack.c.b16 %v2044, %v2040
    %v2329 = vpack.c.b16 %v2049, %v2045
    %v2330 = vpack.c.b16 %v2050, %v2046
    %v2331 = vpack.c.b16 %v2051, %v2047
    %v2332 = vpack.c.b16 %v2052, %v2048
    %v2333 = vpack.c.b16 %v2057, %v2053
    %v2334 = vpack.c.b16 %v2058, %v2054
    %v2335 = vpack.c.b16 %v2059, %v2055
    %v2336 = vpack.c.b16 %v2060, %v2056
    %v2337 = vpack.c.b16 %v2065, %v2061
    %v2338 = vpack.c.b16 %v2066, %v2062
    %v2339 = vpack.c.b16 %v2067, %v2063
    %v2340 = vpack.c.b16 %v2068, %v2064
    %v2341 = vpack.c.b16 %v2073, %v2069
    %v2342 = vpack.c.b16 %v2074, %v2070
    %v2343 = vpack.c.b16 %v2075, %v2071
    %v2344 = vpack.c.b16 %v2076, %v2072
    %v2345 = vpack.c.b16 %v2081, %v2077
    %v2346 = vpack.c.b16 %v2082, %v2078
    %v2347 = vpack.c.b16 %v2083, %v2079
    %v2348 = vpack.c.b16 %v2084, %v2080
    %v2349 = vpack.c.b16 %v2089, %v2085
    %v2350 = vpack.c.b16 %v2090, %v2086
    %v2351 = vpack.c.b16 %v2091, %v2087
    %v2352 = vpack.c.b16 %v2092, %v2088
    %v2353 = vpack.c.b16 %v2097, %v2093
    %v2354 = vpack.c.b16 %v2098, %v2094
    %v2355 = vpack.c.b16 %v2099, %v2095
    %v2356 = vpack.c.b16 %v2100, %v2096
    %2613 = vmatprep.subr.bf16.mxu0 %v2102
    %2614 = vmatpush1.bf16.msra.mxu0 %v2101
    %2615 = vmatprep.subr.bf16.mxu0 %v2106
    %2616 = vmatpush1.bf16.msra.mxu0 %v2105
    %2617 = vmatprep.subr.bf16.mxu0 %v2110
    %2618 = vmatpush1.bf16.msra.mxu0 %v2109
    %2619 = vmatprep.subr.bf16.mxu0 %v2114
    %2620 = vmatpush1.bf16.msra.mxu0 %v2113
    %2621 = vmatprep.subr.bf16.mxu0 %v2118
    %2622 = vmatpush1.bf16.msra.mxu0 %v2117
    %2623 = vmatprep.subr.bf16.mxu0 %v2122
    %2624 = vmatpush1.bf16.msra.mxu0 %v2121
    %2625 = vmatprep.subr.bf16.mxu0 %v2126
    %2626 = vmatpush1.bf16.msra.mxu0 %v2125
    %2627 = vmatprep.subr.bf16.mxu0 %v2130
    %2628 = vmatpush1.bf16.msra.mxu0 %v2129
    %2629 = vmatprep.subr.bf16.mxu0 %v2134
    %2630 = vmatpush1.bf16.msra.mxu0 %v2133
    %2631 = vmatprep.subr.bf16.mxu0 %v2138
    %2632 = vmatpush1.bf16.msra.mxu0 %v2137
    %2633 = vmatprep.subr.bf16.mxu0 %v2142
    %2634 = vmatpush1.bf16.msra.mxu0 %v2141
    %2635 = vmatprep.subr.bf16.mxu0 %v2146
    %2636 = vmatpush1.bf16.msra.mxu0 %v2145
    %2637 = vmatprep.subr.bf16.mxu0 %v2150
    %2638 = vmatpush1.bf16.msra.mxu0 %v2149
    %2639 = vmatprep.subr.bf16.mxu0 %v2154
    %2640 = vmatpush1.bf16.msra.mxu0 %v2153
    %2641 = vmatprep.subr.bf16.mxu0 %v2158
    %2642 = vmatpush1.bf16.msra.mxu0 %v2157
    %2643 = vmatprep.subr.bf16.mxu0 %v2162
    %2644 = vmatpush1.bf16.msra.mxu0 %v2161
    %2645 = vmatprep.mubr.bf16.mxu0 %v1048
    %2646 = vmatmul.mubr.bf16.gmra.mrb[0].mxu0 %v1047
    %v2647 = vpop.f32.mrb[0].mxu0
    %v2648 = vadd.f32 %v1316, %v2647
    %v2649 = vpop.f32.mrb[0].mxu0
    %v2650 = vadd.f32 %v1320, %v2649
    %v2651 = vpop.f32.mrb[0].mxu0
    %v2652 = vpop.f32.mrb[0].mxu0
    %2653 = vdwg.mxu0
    %2654 = vmatprep.subr.bf16.mxu0 %v2166
    %2655 = vmatpush1.bf16.msra.mxu0 %v2165
    %2656 = vmatprep.subr.bf16.mxu0 %v2170
    %2657 = vmatpush1.bf16.msra.mxu0 %v2169
    %2658 = vmatprep.subr.bf16.mxu0 %v2174
    %2659 = vmatpush1.bf16.msra.mxu0 %v2173
    %2660 = vmatprep.subr.bf16.mxu0 %v2178
    %2661 = vmatpush1.bf16.msra.mxu0 %v2177
    %2662 = vmatprep.subr.bf16.mxu0 %v2182
    %2663 = vmatpush1.bf16.msra.mxu0 %v2181
    %2664 = vmatprep.subr.bf16.mxu0 %v2186
    %2665 = vmatpush1.bf16.msra.mxu0 %v2185
    %2666 = vmatprep.subr.bf16.mxu0 %v2190
    %2667 = vmatpush1.bf16.msra.mxu0 %v2189
    %2668 = vmatprep.subr.bf16.mxu0 %v2194
    %2669 = vmatpush1.bf16.msra.mxu0 %v2193
    %2670 = vmatprep.subr.bf16.mxu0 %v2198
    %2671 = vmatpush1.bf16.msra.mxu0 %v2197
    %2672 = vmatprep.subr.bf16.mxu0 %v2202
    %2673 = vmatpush1.bf16.msra.mxu0 %v2201
    %2674 = vmatprep.subr.bf16.mxu0 %v2206
    %2675 = vmatpush1.bf16.msra.mxu0 %v2205
    %2676 = vmatprep.subr.bf16.mxu0 %v2210
    %2677 = vmatpush1.bf16.msra.mxu0 %v2209
    %2678 = vmatprep.subr.bf16.mxu0 %v2214
    %2679 = vmatpush1.bf16.msra.mxu0 %v2213
    %2680 = vmatprep.subr.bf16.mxu0 %v2218
    %2681 = vmatpush1.bf16.msra.mxu0 %v2217
    %2682 = vmatprep.subr.bf16.mxu0 %v2222
    %2683 = vmatpush1.bf16.msra.mxu0 %v2221
    %2684 = vmatprep.subr.bf16.mxu0 %v2226
    %2685 = vmatpush1.bf16.msra.mxu0 %v2225
    %2686 = vmatprep.mubr.bf16.mxu0 %v1050
    %2687 = vmatmul.mubr.bf16.gmra.mrb[0].mxu0 %v1049
    %v2688 = vpop.f32.mrb[0].mxu0
    %v2689 = vadd.f32 %v2648, %v2688
    %v2690 = vpop.f32.mrb[0].mxu0
    %v2691 = vadd.f32 %v2650, %v2690
    %v2692 = vpop.f32.mrb[0].mxu0
    %v2693 = vpop.f32.mrb[0].mxu0
    %2694 = vdwg.mxu0
    %2695 = vmatprep.subr.bf16.mxu0 %v2230
    %2696 = vmatpush1.bf16.msra.mxu0 %v2229
    %2697 = vmatprep.subr.bf16.mxu0 %v2234
    %2698 = vmatpush1.bf16.msra.mxu0 %v2233
    %2699 = vmatprep.subr.bf16.mxu0 %v2238
    %2700 = vmatpush1.bf16.msra.mxu0 %v2237
    %2701 = vmatprep.subr.bf16.mxu0 %v2242
    %2702 = vmatpush1.bf16.msra.mxu0 %v2241
    %2703 = vmatprep.subr.bf16.mxu0 %v2246
    %2704 = vmatpush1.bf16.msra.mxu0 %v2245
    %2705 = vmatprep.subr.bf16.mxu0 %v2250
    %2706 = vmatpush1.bf16.msra.mxu0 %v2249
    %2707 = vmatprep.subr.bf16.mxu0 %v2254
    %2708 = vmatpush1.bf16.msra.mxu0 %v2253
    %2709 = vmatprep.subr.bf16.mxu0 %v2258
    %2710 = vmatpush1.bf16.msra.mxu0 %v2257
    %2711 = vmatprep.subr.bf16.mxu0 %v2262
    %2712 = vmatpush1.bf16.msra.mxu0 %v2261
    %2713 = vmatprep.subr.bf16.mxu0 %v2266
    %2714 = vmatpush1.bf16.msra.mxu0 %v2265
    %2715 = vmatprep.subr.bf16.mxu0 %v2270
    %2716 = vmatpush1.bf16.msra.mxu0 %v2269
    %2717 = vmatprep.subr.bf16.mxu0 %v2274
    %2718 = vmatpush1.bf16.msra.mxu0 %v2273
    %2719 = vmatprep.subr.bf16.mxu0 %v2278
    %2720 = vmatpush1.bf16.msra.mxu0 %v2277
    %2721 = vmatprep.subr.bf16.mxu0 %v2282
    %2722 = vmatpush1.bf16.msra.mxu0 %v2281
    %2723 = vmatprep.subr.bf16.mxu0 %v2286
    %2724 = vmatpush1.bf16.msra.mxu0 %v2285
    %2725 = vmatprep.subr.bf16.mxu0 %v2290
    %2726 = vmatpush1.bf16.msra.mxu0 %v2289
    %2727 = vmatprep.mubr.bf16.mxu0 %v1052
    %2728 = vmatmul.mubr.bf16.gmra.mrb[0].mxu0 %v1051
    %v2729 = vpop.f32.mrb[0].mxu0
    %v2730 = vadd.f32 %v2689, %v2729
    %v2731 = vpop.f32.mrb[0].mxu0
    %v2732 = vadd.f32 %v2691, %v2731
    %v2733 = vpop.f32.mrb[0].mxu0
    %v2734 = vpop.f32.mrb[0].mxu0
    %2735 = vdwg.mxu0
    %2736 = vmatprep.subr.bf16.mxu0 %v2294
    %2737 = vmatpush1.bf16.msra.mxu0 %v2293
    %2738 = vmatprep.subr.bf16.mxu0 %v2298
    %2739 = vmatpush1.bf16.msra.mxu0 %v2297
    %2740 = vmatprep.subr.bf16.mxu0 %v2302
    %2741 = vmatpush1.bf16.msra.mxu0 %v2301
    %2742 = vmatprep.subr.bf16.mxu0 %v2306
    %2743 = vmatpush1.bf16.msra.mxu0 %v2305
    %2744 = vmatprep.subr.bf16.mxu0 %v2310
    %2745 = vmatpush1.bf16.msra.mxu0 %v2309
    %2746 = vmatprep.subr.bf16.mxu0 %v2314
    %2747 = vmatpush1.bf16.msra.mxu0 %v2313
    %2748 = vmatprep.subr.bf16.mxu0 %v2318
    %2749 = vmatpush1.bf16.msra.mxu0 %v2317
    %2750 = vmatprep.subr.bf16.mxu0 %v2322
    %2751 = vmatpush1.bf16.msra.mxu0 %v2321
    %2752 = vmatprep.subr.bf16.mxu0 %v2326
    %2753 = vmatpush1.bf16.msra.mxu0 %v2325
    %2754 = vmatprep.subr.bf16.mxu0 %v2330
    %2755 = vmatpush1.bf16.msra.mxu0 %v2329
    %2756 = vmatprep.subr.bf16.mxu0 %v2334
    %2757 = vmatpush1.bf16.msra.mxu0 %v2333
    %2758 = vmatprep.subr.bf16.mxu0 %v2338
    %2759 = vmatpush1.bf16.msra.mxu0 %v2337
    %2760 = vmatprep.subr.bf16.mxu0 %v2342
    %2761 = vmatpush1.bf16.msra.mxu0 %v2341
    %2762 = vmatprep.subr.bf16.mxu0 %v2346
    %2763 = vmatpush1.bf16.msra.mxu0 %v2345
    %2764 = vmatprep.subr.bf16.mxu0 %v2350
    %2765 = vmatpush1.bf16.msra.mxu0 %v2349
    %2766 = vmatprep.subr.bf16.mxu0 %v2354
    %2767 = vmatpush1.bf16.msra.mxu0 %v2353
    %2768 = vmatprep.mubr.bf16.mxu0 %v1054
    %2769 = vmatmul.mubr.bf16.gmra.mrb[0].mxu0 %v1053
    %v2770 = vpop.f32.mrb[0].mxu0
    %v2771 = vadd.f32 %v2730, %v2770
    %v2772 = vpop.f32.mrb[0].mxu0
    %v2773 = vadd.f32 %v2732, %v2772
    %v2774 = vpop.f32.mrb[0].mxu0
    %v2775 = vpop.f32.mrb[0].mxu0
    %2776 = vdwg.mxu0
    %2777 = vmatprep.subr.bf16.mxu0 %v2104
    %2778 = vmatpush1.bf16.msra.mxu0 %v2103
    %2779 = vmatprep.subr.bf16.mxu0 %v2108
    %2780 = vmatpush1.bf16.msra.mxu0 %v2107
    %2781 = vmatprep.subr.bf16.mxu0 %v2112
    %2782 = vmatpush1.bf16.msra.mxu0 %v2111
    %2783 = vmatprep.subr.bf16.mxu0 %v2116
    %2784 = vmatpush1.bf16.msra.mxu0 %v2115
    %2785 = vmatprep.subr.bf16.mxu0 %v2120
    %2786 = vmatpush1.bf16.msra.mxu0 %v2119
    %2787 = vmatprep.subr.bf16.mxu0 %v2124
    %2788 = vmatpush1.bf16.msra.mxu0 %v2123
    %2789 = vmatprep.subr.bf16.mxu0 %v2128
    %2790 = vmatpush1.bf16.msra.mxu0 %v2127
    %2791 = vmatprep.subr.bf16.mxu0 %v2132
    %2792 = vmatpush1.bf16.msra.mxu0 %v2131
    %2793 = vmatprep.subr.bf16.mxu0 %v2136
    %2794 = vmatpush1.bf16.msra.mxu0 %v2135
    %2795 = vmatprep.subr.bf16.mxu0 %v2140
    %2796 = vmatpush1.bf16.msra.mxu0 %v2139
    %2797 = vmatprep.subr.bf16.mxu0 %v2144
    %2798 = vmatpush1.bf16.msra.mxu0 %v2143
    %2799 = vmatprep.subr.bf16.mxu0 %v2148
    %2800 = vmatpush1.bf16.msra.mxu0 %v2147
    %2801 = vmatprep.subr.bf16.mxu0 %v2152
    %2802 = vmatpush1.bf16.msra.mxu0 %v2151
    %2803 = vmatprep.subr.bf16.mxu0 %v2156
    %2804 = vmatpush1.bf16.msra.mxu0 %v2155
    %2805 = vmatprep.subr.bf16.mxu0 %v2160
    %2806 = vmatpush1.bf16.msra.mxu0 %v2159
    %2807 = vmatprep.subr.bf16.mxu0 %v2164
    %2808 = vmatpush1.bf16.msra.mxu0 %v2163
    %2809 = vmatprep.mubr.bf16.mxu0 %v1048
    %2810 = vmatmul.mubr.bf16.gmra.mrb[0].mxu0 %v1047
    %v2811 = vpop.f32.mrb[0].mxu0
    %v2812 = vadd.f32 %v1324, %v2811
    %v2813 = vpop.f32.mrb[0].mxu0
    %v2814 = vadd.f32 %v1328, %v2813
    %v2815 = vpop.f32.mrb[0].mxu0
    %v2816 = vpop.f32.mrb[0].mxu0
    %2817 = vdwg.mxu0
    %2818 = vmatprep.subr.bf16.mxu0 %v2168
    %2819 = vmatpush1.bf16.msra.mxu0 %v2167
    %2820 = vmatprep.subr.bf16.mxu0 %v2172
    %2821 = vmatpush1.bf16.msra.mxu0 %v2171
    %2822 = vmatprep.subr.bf16.mxu0 %v2176
    %2823 = vmatpush1.bf16.msra.mxu0 %v2175
    %2824 = vmatprep.subr.bf16.mxu0 %v2180
    %2825 = vmatpush1.bf16.msra.mxu0 %v2179
    %2826 = vmatprep.subr.bf16.mxu0 %v2184
    %2827 = vmatpush1.bf16.msra.mxu0 %v2183
    %2828 = vmatprep.subr.bf16.mxu0 %v2188
    %2829 = vmatpush1.bf16.msra.mxu0 %v2187
    %2830 = vmatprep.subr.bf16.mxu0 %v2192
    %2831 = vmatpush1.bf16.msra.mxu0 %v2191
    %2832 = vmatprep.subr.bf16.mxu0 %v2196
    %2833 = vmatpush1.bf16.msra.mxu0 %v2195
    %2834 = vmatprep.subr.bf16.mxu0 %v2200
    %2835 = vmatpush1.bf16.msra.mxu0 %v2199
    %2836 = vmatprep.subr.bf16.mxu0 %v2204
    %2837 = vmatpush1.bf16.msra.mxu0 %v2203
    %2838 = vmatprep.subr.bf16.mxu0 %v2208
    %2839 = vmatpush1.bf16.msra.mxu0 %v2207
    %2840 = vmatprep.subr.bf16.mxu0 %v2212
    %2841 = vmatpush1.bf16.msra.mxu0 %v2211
    %2842 = vmatprep.subr.bf16.mxu0 %v2216
    %2843 = vmatpush1.bf16.msra.mxu0 %v2215
    %2844 = vmatprep.subr.bf16.mxu0 %v2220
    %2845 = vmatpush1.bf16.msra.mxu0 %v2219
    %2846 = vmatprep.subr.bf16.mxu0 %v2224
    %2847 = vmatpush1.bf16.msra.mxu0 %v2223
    %2848 = vmatprep.subr.bf16.mxu0 %v2228
    %2849 = vmatpush1.bf16.msra.mxu0 %v2227
    %2850 = vmatprep.mubr.bf16.mxu0 %v1050
    %2851 = vmatmul.mubr.bf16.gmra.mrb[0].mxu0 %v1049
    %v2852 = vpop.f32.mrb[0].mxu0
    %v2853 = vadd.f32 %v2812, %v2852
    %v2854 = vpop.f32.mrb[0].mxu0
    %v2855 = vadd.f32 %v2814, %v2854
    %v2856 = vpop.f32.mrb[0].mxu0
    %v2857 = vpop.f32.mrb[0].mxu0
    %2858 = vdwg.mxu0
    %2859 = vmatprep.subr.bf16.mxu0 %v2232
    %2860 = vmatpush1.bf16.msra.mxu0 %v2231
    %2861 = vmatprep.subr.bf16.mxu0 %v2236
    %2862 = vmatpush1.bf16.msra.mxu0 %v2235
    %2863 = vmatprep.subr.bf16.mxu0 %v2240
    %2864 = vmatpush1.bf16.msra.mxu0 %v2239
    %2865 = vmatprep.subr.bf16.mxu0 %v2244
    %2866 = vmatpush1.bf16.msra.mxu0 %v2243
    %2867 = vmatprep.subr.bf16.mxu0 %v2248
    %2868 = vmatpush1.bf16.msra.mxu0 %v2247
    %2869 = vmatprep.subr.bf16.mxu0 %v2252
    %2870 = vmatpush1.bf16.msra.mxu0 %v2251
    %2871 = vmatprep.subr.bf16.mxu0 %v2256
    %2872 = vmatpush1.bf16.msra.mxu0 %v2255
    %2873 = vmatprep.subr.bf16.mxu0 %v2260
    %2874 = vmatpush1.bf16.msra.mxu0 %v2259
    %2875 = vmatprep.subr.bf16.mxu0 %v2264
    %2876 = vmatpush1.bf16.msra.mxu0 %v2263
    %2877 = vmatprep.subr.bf16.mxu0 %v2268
    %2878 = vmatpush1.bf16.msra.mxu0 %v2267
    %2879 = vmatprep.subr.bf16.mxu0 %v2272
    %2880 = vmatpush1.bf16.msra.mxu0 %v2271
    %2881 = vmatprep.subr.bf16.mxu0 %v2276
    %2882 = vmatpush1.bf16.msra.mxu0 %v2275
    %2883 = vmatprep.subr.bf16.mxu0 %v2280
    %2884 = vmatpush1.bf16.msra.mxu0 %v2279
    %2885 = vmatprep.subr.bf16.mxu0 %v2284
    %2886 = vmatpush1.bf16.msra.mxu0 %v2283
    %2887 = vmatprep.subr.bf16.mxu0 %v2288
    %2888 = vmatpush1.bf16.msra.mxu0 %v2287
    %2889 = vmatprep.subr.bf16.mxu0 %v2292
    %2890 = vmatpush1.bf16.msra.mxu0 %v2291
    %2891 = vmatprep.mubr.bf16.mxu0 %v1052
    %2892 = vmatmul.mubr.bf16.gmra.mrb[0].mxu0 %v1051
    %v2893 = vpop.f32.mrb[0].mxu0
    %v2894 = vadd.f32 %v2853, %v2893
    %v2895 = vpop.f32.mrb[0].mxu0
    %v2896 = vadd.f32 %v2855, %v2895
    %v2897 = vpop.f32.mrb[0].mxu0
    %v2898 = vpop.f32.mrb[0].mxu0
    %2899 = vdwg.mxu0
    %2900 = vmatprep.subr.bf16.mxu0 %v2296
    %2901 = vmatpush1.bf16.msra.mxu0 %v2295
    %2902 = vmatprep.subr.bf16.mxu0 %v2300
    %2903 = vmatpush1.bf16.msra.mxu0 %v2299
    %2904 = vmatprep.subr.bf16.mxu0 %v2304
    %2905 = vmatpush1.bf16.msra.mxu0 %v2303
    %2906 = vmatprep.subr.bf16.mxu0 %v2308
    %2907 = vmatpush1.bf16.msra.mxu0 %v2307
    %2908 = vmatprep.subr.bf16.mxu0 %v2312
    %2909 = vmatpush1.bf16.msra.mxu0 %v2311
    %2910 = vmatprep.subr.bf16.mxu0 %v2316
    %2911 = vmatpush1.bf16.msra.mxu0 %v2315
    %2912 = vmatprep.subr.bf16.mxu0 %v2320
    %2913 = vmatpush1.bf16.msra.mxu0 %v2319
    %2914 = vmatprep.subr.bf16.mxu0 %v2324
    %2915 = vmatpush1.bf16.msra.mxu0 %v2323
    %2916 = vmatprep.subr.bf16.mxu0 %v2328
    %2917 = vmatpush1.bf16.msra.mxu0 %v2327
    %2918 = vmatprep.subr.bf16.mxu0 %v2332
    %2919 = vmatpush1.bf16.msra.mxu0 %v2331
    %2920 = vmatprep.subr.bf16.mxu0 %v2336
    %2921 = vmatpush1.bf16.msra.mxu0 %v2335
    %2922 = vmatprep.subr.bf16.mxu0 %v2340
    %2923 = vmatpush1.bf16.msra.mxu0 %v2339
    %2924 = vmatprep.subr.bf16.mxu0 %v2344
    %2925 = vmatpush1.bf16.msra.mxu0 %v2343
    %2926 = vmatprep.subr.bf16.mxu0 %v2348
    %2927 = vmatpush1.bf16.msra.mxu0 %v2347
    %2928 = vmatprep.subr.bf16.mxu0 %v2352
    %2929 = vmatpush1.bf16.msra.mxu0 %v2351
    %2930 = vmatprep.subr.bf16.mxu0 %v2356
    %2931 = vmatpush1.bf16.msra.mxu0 %v2355
    %2932 = vmatprep.mubr.bf16.mxu0 %v1054
    %2933 = vmatmul.mubr.bf16.gmra.mrb[0].mxu0 %v1053
    %v2934 = vpop.f32.mrb[0].mxu0
    %v2935 = vadd.f32 %v2894, %v2934
    %v2936 = vpop.f32.mrb[0].mxu0
    %v2937 = vadd.f32 %v2896, %v2936
    %v2938 = vpop.f32.mrb[0].mxu0
    %v2939 = vpop.f32.mrb[0].mxu0
    %2940 = vdwg.mxu0
    %v2941 = vmax.f32 %v2771, 0.0
    %v2942 = vmax.f32 %v2773, 0.0
    %v2943 = vmax.f32 %v2935, 0.0
    %v2944 = vmax.f32 %v2937, 0.0
    %v2945 = vpack.c.bf16 %v2941, %v2941
    %v2946 = vpack.c.bf16 %v2942, %v2942
    %v2947 = vpack.c.bf16 %v2943, %v2943
    %v2948 = vpack.c.bf16 %v2944, %v2944
    %v2949 = vld [vmem:[%s6] sm:$0xf]
    %v2950 = vld [vmem:[%s6 + $0x4] sm:$0xf]
    %v2951 = vld [vmem:[%s6 + $0x8] sm:$0xf]
    %v2952 = vld [vmem:[%s6 + $0xc] sm:$0xf]
    %v2953 = vld [vmem:[%s6 + $0x10] sm:$0xf]
    %v2954 = vld [vmem:[%s6 + $0x14] sm:$0xf]
    %v2955 = vld [vmem:[%s6 + $0x18] sm:$0xf]
    %v2956 = vld [vmem:[%s6 + $0x1c] sm:$0xf]
    %v2957 = vld [vmem:[%s6 + $0x20] sm:$0xf]
    %v2958 = vld [vmem:[%s6 + $0x24] sm:$0xf]
    %v2959 = vld [vmem:[%s6 + $0x28] sm:$0xf]
    %v2960 = vld [vmem:[%s6 + $0x2c] sm:$0xf]
    %v2961 = vld [vmem:[%s6 + $0x30] sm:$0xf]
    %v2962 = vld [vmem:[%s6 + $0x34] sm:$0xf]
    %v2963 = vld [vmem:[%s6 + $0x38] sm:$0xf]
    %v2964 = vld [vmem:[%s6 + $0x3c] sm:$0xf]
    %v2965 = vld [vmem:[%s6 + $0x40] sm:$0xf]
    %v2966 = vld [vmem:[%s6 + $0x44] sm:$0xf]
    %v2967 = vld [vmem:[%s6 + $0x48] sm:$0xf]
    %v2968 = vld [vmem:[%s6 + $0x4c] sm:$0xf]
    %v2969 = vld [vmem:[%s6 + $0x50] sm:$0xf]
    %v2970 = vld [vmem:[%s6 + $0x54] sm:$0xf]
    %v2971 = vld [vmem:[%s6 + $0x58] sm:$0xf]
    %v2972 = vld [vmem:[%s6 + $0x5c] sm:$0xf]
    %v2973 = vld [vmem:[%s6 + $0x60] sm:$0xf]
    %v2974 = vld [vmem:[%s6 + $0x64] sm:$0xf]
    %v2975 = vld [vmem:[%s6 + $0x68] sm:$0xf]
    %v2976 = vld [vmem:[%s6 + $0x6c] sm:$0xf]
    %v2977 = vld [vmem:[%s6 + $0x70] sm:$0xf]
    %v2978 = vld [vmem:[%s6 + $0x74] sm:$0xf]
    %v2979 = vld [vmem:[%s6 + $0x78] sm:$0xf]
    %v2980 = vld [vmem:[%s6 + $0x7c] sm:$0xf]
    %v2981 = vld [vmem:[%s6 + $0x80] sm:$0xf]
    %v2982 = vld [vmem:[%s6 + $0x84] sm:$0xf]
    %v2983 = vld [vmem:[%s6 + $0x88] sm:$0xf]
    %v2984 = vld [vmem:[%s6 + $0x8c] sm:$0xf]
    %v2985 = vld [vmem:[%s6 + $0x90] sm:$0xf]
    %v2986 = vld [vmem:[%s6 + $0x94] sm:$0xf]
    %v2987 = vld [vmem:[%s6 + $0x98] sm:$0xf]
    %v2988 = vld [vmem:[%s6 + $0x9c] sm:$0xf]
    %v2989 = vld [vmem:[%s6 + $0xa0] sm:$0xf]
    %v2990 = vld [vmem:[%s6 + $0xa4] sm:$0xf]
    %v2991 = vld [vmem:[%s6 + $0xa8] sm:$0xf]
    %v2992 = vld [vmem:[%s6 + $0xac] sm:$0xf]
    %v2993 = vld [vmem:[%s6 + $0xb0] sm:$0xf]
    %v2994 = vld [vmem:[%s6 + $0xb4] sm:$0xf]
    %v2995 = vld [vmem:[%s6 + $0xb8] sm:$0xf]
    %v2996 = vld [vmem:[%s6 + $0xbc] sm:$0xf]
    %v2997 = vld [vmem:[%s6 + $0xc0] sm:$0xf]
    %v2998 = vld [vmem:[%s6 + $0xc4] sm:$0xf]
    %v2999 = vld [vmem:[%s6 + $0xc8] sm:$0xf]
    %v3000 = vld [vmem:[%s6 + $0xcc] sm:$0xf]
    %v3001 = vld [vmem:[%s6 + $0xd0] sm:$0xf]
    %v3002 = vld [vmem:[%s6 + $0xd4] sm:$0xf]
    %v3003 = vld [vmem:[%s6 + $0xd8] sm:$0xf]
    %v3004 = vld [vmem:[%s6 + $0xdc] sm:$0xf]
    %v3005 = vld [vmem:[%s6 + $0xe0] sm:$0xf]
    %v3006 = vld [vmem:[%s6 + $0xe4] sm:$0xf]
    %v3007 = vld [vmem:[%s6 + $0xe8] sm:$0xf]
    %v3008 = vld [vmem:[%s6 + $0xec] sm:$0xf]
    %v3009 = vld [vmem:[%s6 + $0xf0] sm:$0xf]
    %v3010 = vld [vmem:[%s6 + $0xf4] sm:$0xf]
    %v3011 = vld [vmem:[%s6 + $0xf8] sm:$0xf]
    %v3012 = vld [vmem:[%s6 + $0xfc] sm:$0xf]
    %v3013 = vld [vmem:[%s7] sm:$0x1]
    %v3015 = vlaneseq
    %v3016 = vshrl.u32 %v3015, 7
    %v3017 = vsub.s32 0, %v3016
    %v3018 = vrot.slane %v3013, %v3017
    %v3084 = vunpack.c.l.b16 %v2949
    %v3085 = vunpack.c.l.b16 %v2950
    %v3086 = vunpack.c.l.b16 %v2951
    %v3087 = vunpack.c.l.b16 %v2952
    %v3088 = vunpack.c.l.b16 %v2953
    %v3089 = vunpack.c.l.b16 %v2954
    %v3090 = vunpack.c.l.b16 %v2955
    %v3091 = vunpack.c.l.b16 %v2956
    %v3092 = vunpack.c.l.b16 %v2957
    %v3093 = vunpack.c.l.b16 %v2958
    %v3094 = vunpack.c.l.b16 %v2959
    %v3095 = vunpack.c.l.b16 %v2960
    %v3096 = vunpack.c.l.b16 %v2961
    %v3097 = vunpack.c.l.b16 %v2962
    %v3098 = vunpack.c.l.b16 %v2963
    %v3099 = vunpack.c.l.b16 %v2964
    %v3100 = vunpack.c.l.b16 %v2965
    %v3101 = vunpack.c.l.b16 %v2966
    %v3102 = vunpack.c.l.b16 %v2967
    %v3103 = vunpack.c.l.b16 %v2968
    %v3104 = vunpack.c.l.b16 %v2969
    %v3105 = vunpack.c.l.b16 %v2970
    %v3106 = vunpack.c.l.b16 %v2971
    %v3107 = vunpack.c.l.b16 %v2972
    %v3108 = vunpack.c.l.b16 %v2973
    %v3109 = vunpack.c.l.b16 %v2974
    %v3110 = vunpack.c.l.b16 %v2975
    %v3111 = vunpack.c.l.b16 %v2976
    %v3112 = vunpack.c.l.b16 %v2977
    %v3113 = vunpack.c.l.b16 %v2978
    %v3114 = vunpack.c.l.b16 %v2979
    %v3115 = vunpack.c.l.b16 %v2980
    %v3116 = vunpack.c.l.b16 %v2981
    %v3117 = vunpack.c.l.b16 %v2982
    %v3118 = vunpack.c.l.b16 %v2983
    %v3119 = vunpack.c.l.b16 %v2984
    %v3120 = vunpack.c.l.b16 %v2985
    %v3121 = vunpack.c.l.b16 %v2986
    %v3122 = vunpack.c.l.b16 %v2987
    %v3123 = vunpack.c.l.b16 %v2988
    %v3124 = vunpack.c.l.b16 %v2989
    %v3125 = vunpack.c.l.b16 %v2990
    %v3126 = vunpack.c.l.b16 %v2991
    %v3127 = vunpack.c.l.b16 %v2992
    %v3128 = vunpack.c.l.b16 %v2993
    %v3129 = vunpack.c.l.b16 %v2994
    %v3130 = vunpack.c.l.b16 %v2995
    %v3131 = vunpack.c.l.b16 %v2996
    %v3132 = vunpack.c.l.b16 %v2997
    %v3133 = vunpack.c.l.b16 %v2998
    %v3134 = vunpack.c.l.b16 %v2999
    %v3135 = vunpack.c.l.b16 %v3000
    %v3136 = vunpack.c.l.b16 %v3001
    %v3137 = vunpack.c.l.b16 %v3002
    %v3138 = vunpack.c.l.b16 %v3003
    %v3139 = vunpack.c.l.b16 %v3004
    %v3140 = vunpack.c.l.b16 %v3005
    %v3141 = vunpack.c.l.b16 %v3006
    %v3142 = vunpack.c.l.b16 %v3007
    %v3143 = vunpack.c.l.b16 %v3008
    %v3144 = vunpack.c.l.b16 %v3009
    %v3145 = vunpack.c.l.b16 %v3010
    %v3146 = vunpack.c.l.b16 %v3011
    %v3147 = vunpack.c.l.b16 %v3012
    %v3148 = vpack.c.b16 %v3085, %v3084
    %v3149 = vpack.c.b16 %v3087, %v3086
    %v3150 = vpack.c.b16 %v3089, %v3088
    %v3151 = vpack.c.b16 %v3091, %v3090
    %v3152 = vpack.c.b16 %v3093, %v3092
    %v3153 = vpack.c.b16 %v3095, %v3094
    %v3154 = vpack.c.b16 %v3097, %v3096
    %v3155 = vpack.c.b16 %v3099, %v3098
    %v3156 = vpack.c.b16 %v3101, %v3100
    %v3157 = vpack.c.b16 %v3103, %v3102
    %v3158 = vpack.c.b16 %v3105, %v3104
    %v3159 = vpack.c.b16 %v3107, %v3106
    %v3160 = vpack.c.b16 %v3109, %v3108
    %v3161 = vpack.c.b16 %v3111, %v3110
    %v3162 = vpack.c.b16 %v3113, %v3112
    %v3163 = vpack.c.b16 %v3115, %v3114
    %v3164 = vpack.c.b16 %v3117, %v3116
    %v3165 = vpack.c.b16 %v3119, %v3118
    %v3166 = vpack.c.b16 %v3121, %v3120
    %v3167 = vpack.c.b16 %v3123, %v3122
    %v3168 = vpack.c.b16 %v3125, %v3124
    %v3169 = vpack.c.b16 %v3127, %v3126
    %v3170 = vpack.c.b16 %v3129, %v3128
    %v3171 = vpack.c.b16 %v3131, %v3130
    %v3172 = vpack.c.b16 %v3133, %v3132
    %v3173 = vpack.c.b16 %v3135, %v3134
    %v3174 = vpack.c.b16 %v3137, %v3136
    %v3175 = vpack.c.b16 %v3139, %v3138
    %v3176 = vpack.c.b16 %v3141, %v3140
    %v3177 = vpack.c.b16 %v3143, %v3142
    %v3178 = vpack.c.b16 %v3145, %v3144
    %v3179 = vpack.c.b16 %v3147, %v3146
    %3212 = vmatprep.subr.bf16.mxu0 0
    %3213 = vmatpush1.bf16.msra.mxu0 %v3148
    %3214 = vmatprep.subr.bf16.mxu0 0
    %3215 = vmatpush1.bf16.msra.mxu0 %v3149
    %3216 = vmatprep.subr.bf16.mxu0 0
    %3217 = vmatpush1.bf16.msra.mxu0 %v3150
    %3218 = vmatprep.subr.bf16.mxu0 0
    %3219 = vmatpush1.bf16.msra.mxu0 %v3151
    %3220 = vmatprep.subr.bf16.mxu0 0
    %3221 = vmatpush1.bf16.msra.mxu0 %v3152
    %3222 = vmatprep.subr.bf16.mxu0 0
    %3223 = vmatpush1.bf16.msra.mxu0 %v3153
    %3224 = vmatprep.subr.bf16.mxu0 0
    %3225 = vmatpush1.bf16.msra.mxu0 %v3154
    %3226 = vmatprep.subr.bf16.mxu0 0
    %3227 = vmatpush1.bf16.msra.mxu0 %v3155
    %3228 = vmatprep.subr.bf16.mxu0 0
    %3229 = vmatpush1.bf16.msra.mxu0 %v3156
    %3230 = vmatprep.subr.bf16.mxu0 0
    %3231 = vmatpush1.bf16.msra.mxu0 %v3157
    %3232 = vmatprep.subr.bf16.mxu0 0
    %3233 = vmatpush1.bf16.msra.mxu0 %v3158
    %3234 = vmatprep.subr.bf16.mxu0 0
    %3235 = vmatpush1.bf16.msra.mxu0 %v3159
    %3236 = vmatprep.subr.bf16.mxu0 0
    %3237 = vmatpush1.bf16.msra.mxu0 %v3160
    %3238 = vmatprep.subr.bf16.mxu0 0
    %3239 = vmatpush1.bf16.msra.mxu0 %v3161
    %3240 = vmatprep.subr.bf16.mxu0 0
    %3241 = vmatpush1.bf16.msra.mxu0 %v3162
    %3242 = vmatprep.subr.bf16.mxu0 0
    %3243 = vmatpush1.bf16.msra.mxu0 %v3163
    %3244 = vmatprep.mubr.bf16.mxu0 %v2946
    %3245 = vmatmul.mubr.bf16.gmra.mrb[0].mxu0 %v2945
    %v3246 = vpop.f32.mrb[0].mxu0
    %v3247 = vadd.f32 %v3018, %v3246
    %v3248 = vpop.f32.mrb[0].mxu0
    %v3249 = vpop.f32.mrb[0].mxu0
    %v3250 = vpop.f32.mrb[0].mxu0
    %3251 = vdwg.mxu0
    %3252 = vmatprep.subr.bf16.mxu0 0
    %3253 = vmatpush1.bf16.msra.mxu0 %v3164
    %3254 = vmatprep.subr.bf16.mxu0 0
    %3255 = vmatpush1.bf16.msra.mxu0 %v3165
    %3256 = vmatprep.subr.bf16.mxu0 0
    %3257 = vmatpush1.bf16.msra.mxu0 %v3166
    %3258 = vmatprep.subr.bf16.mxu0 0
    %3259 = vmatpush1.bf16.msra.mxu0 %v3167
    %3260 = vmatprep.subr.bf16.mxu0 0
    %3261 = vmatpush1.bf16.msra.mxu0 %v3168
    %3262 = vmatprep.subr.bf16.mxu0 0
    %3263 = vmatpush1.bf16.msra.mxu0 %v3169
    %3264 = vmatprep.subr.bf16.mxu0 0
    %3265 = vmatpush1.bf16.msra.mxu0 %v3170
    %3266 = vmatprep.subr.bf16.mxu0 0
    %3267 = vmatpush1.bf16.msra.mxu0 %v3171
    %3268 = vmatprep.subr.bf16.mxu0 0
    %3269 = vmatpush1.bf16.msra.mxu0 %v3172
    %3270 = vmatprep.subr.bf16.mxu0 0
    %3271 = vmatpush1.bf16.msra.mxu0 %v3173
    %3272 = vmatprep.subr.bf16.mxu0 0
    %3273 = vmatpush1.bf16.msra.mxu0 %v3174
    %3274 = vmatprep.subr.bf16.mxu0 0
    %3275 = vmatpush1.bf16.msra.mxu0 %v3175
    %3276 = vmatprep.subr.bf16.mxu0 0
    %3277 = vmatpush1.bf16.msra.mxu0 %v3176
    %3278 = vmatprep.subr.bf16.mxu0 0
    %3279 = vmatpush1.bf16.msra.mxu0 %v3177
    %3280 = vmatprep.subr.bf16.mxu0 0
    %3281 = vmatpush1.bf16.msra.mxu0 %v3178
    %3282 = vmatprep.subr.bf16.mxu0 0
    %3283 = vmatpush1.bf16.msra.mxu0 %v3179
    %3284 = vmatprep.mubr.bf16.mxu0 %v2948
    %3285 = vmatmul.mubr.bf16.gmra.mrb[0].mxu0 %v2947
    %v3286 = vpop.f32.mrb[0].mxu0
    %v3287 = vadd.f32 %v3247, %v3286
    %v3288 = vpop.f32.mrb[0].mxu0
    %v3289 = vpop.f32.mrb[0].mxu0
    %v3290 = vpop.f32.mrb[0].mxu0
    %3291 = vdwg.mxu0
    %v3292 = vld [vmem:[%s1] sm:$0xff]
    %v3293 = vpack.c.bf16 %v3292, %v3292
    %v3294 = vld [vmem:[%s8] sm:$0xf]
    %v3295 = vld [vmem:[%s8 + $0x4] sm:$0xf]
    %v3298 = vunpack.c.l.b16 %v3294
    %v3299 = vunpack.c.l.b16 %v3295
    %v3300 = vpack.c.b16 %v3299, %v3298
    %vm3302 = vcmask 130048
    %v3304 = vsel %vm3302, %v3293, 0
    %3306 = vmatprep.subr.bf16.mxu0 0
    %3307 = vmatpush1.bf16.msra.mxu0 %v3300
    %3308 = vmatprep.subr.bf16.mxu0 0
    %3309 = vmatpush1.bf16.msra.mxu0 0
    %3310 = vmatprep.subr.bf16.mxu0 0
    %3311 = vmatpush1.bf16.msra.mxu0 0
    %3312 = vmatprep.subr.bf16.mxu0 0
    %3313 = vmatpush1.bf16.msra.mxu0 0
    %3314 = vmatprep.subr.bf16.mxu0 0
    %3315 = vmatpush1.bf16.msra.mxu0 0
    %3316 = vmatprep.subr.bf16.mxu0 0
    %3317 = vmatpush1.bf16.msra.mxu0 0
    %3318 = vmatprep.subr.bf16.mxu0 0
    %3319 = vmatpush1.bf16.msra.mxu0 0
    %3320 = vmatprep.subr.bf16.mxu0 0
    %3321 = vmatpush1.bf16.msra.mxu0 0
    %3322 = vmatprep.subr.bf16.mxu0 0
    %3323 = vmatpush1.bf16.msra.mxu0 0
    %3324 = vmatprep.subr.bf16.mxu0 0
    %3325 = vmatpush1.bf16.msra.mxu0 0
    %3326 = vmatprep.subr.bf16.mxu0 0
    %3327 = vmatpush1.bf16.msra.mxu0 0
    %3328 = vmatprep.subr.bf16.mxu0 0
    %3329 = vmatpush1.bf16.msra.mxu0 0
    %3330 = vmatprep.subr.bf16.mxu0 0
    %3331 = vmatpush1.bf16.msra.mxu0 0
    %3332 = vmatprep.subr.bf16.mxu0 0
    %3333 = vmatpush1.bf16.msra.mxu0 0
    %3334 = vmatprep.subr.bf16.mxu0 0
    %3335 = vmatpush1.bf16.msra.mxu0 0
    %3336 = vmatprep.subr.bf16.mxu0 0
    %3337 = vmatpush1.bf16.msra.mxu0 0
    %3338 = vmatprep.mubr.bf16.mxu0 0
    %3339 = vmatmul.mubr.bf16.gmra.mrb[0].mxu0 %v3304
    %v3340 = vpop.f32.mrb[0].mxu0
    %v3341 = vadd.f32 0.0, %v3340
    %v3342 = vpop.f32.mrb[0].mxu0
    %v3343 = vpop.f32.mrb[0].mxu0
    %v3344 = vpop.f32.mrb[0].mxu0
    %3345 = vdwg.mxu0
    %v3346 = vmax.f32 %v3341, 0.0
    %v3347 = vmul.f32 %v3287, %v3346
    %vm3348 = vcmask 261120
    %v3349 = vsel %vm3348, %v3347, 0.0
    %3350 = vadd.xlane.f32.xlu0 %v3349
    %v3351 = vpop.xlane.xlu0 %3350
    %vm3352 = vcmask 7168
    %3353 = vst.msk [vmem:[%s9] sm:$0xff] %vm3352, %v3351
    // Predicated region
    $region46: #{_forward_core.1} parent=1 // pred_check
      _
    $region47: #{_forward_core.1} parent=1 // pred_check_branch
      %3355 = sbr.rel (0) target = $region49
    $region48: #{_forward_core.1} parent=1 // pred_region
      _
    $region49: #{_forward_core.1} parent=1 // pred_fallthru
      _
    // Predicated region
    $region50: #{_forward_core.1} parent=1 // pred_check
      _
    $region51: #{_forward_core.1} parent=1 // pred_check_branch
      %3357 = sbr.rel (0) target = $region53
    $region52: #{_forward_core.1} parent=1 // pred_region
      _
    $region53: #{_forward_core.1} parent=1 // pred_fallthru
      _
    %3358 = vsyncpa [#allocation3], 1
    %3359 = vsyncpa [#allocation5], 1

</llo_original>
